<compile_context>
chip_gen: v7x
topology: tpu7x:2x2x1
jax: 0.10.0
libtpu: 0.0.40
codegen_flags: <defaults>
</compile_context>

<pallas_src>
import functools
import math

import jax
import jax.numpy as jnp
from jax.experimental import pallas as pl
from jax.experimental.pallas import tpu as pltpu


def _round_up(x, m):
    return ((x + m - 1) // m) * m


def _pad_to(x, axis, target):
    pad = target - x.shape[axis]
    if pad <= 0:
        return x
    widths = [(0, 0)] * x.ndim
    widths[axis] = (0, pad)
    return jnp.pad(x, widths)


def _full_spec(shape):
    nd = len(shape)
    return pl.BlockSpec(shape, lambda *_, nd=nd: (0,) * nd)


def _gru_net_kernel(num_layers, seq_len, b_pad, hidden, h_pad, gate_pad,
                    gi0_ref, *refs):
    """Single invocation: full GRU stack over all time steps + final FC.

    refs layout:
      inputs : layer 0 -> (w_hh, b_hh_n)
               layer l>=1 -> (w_ih, bias_fold, w_hh, b_hh_n)
               then w_fc, b_fc
      outputs: out
      scratch: h_col [, gi  (only if num_layers > 1)]
    """
    L, S, Bp, H, Hh, G = num_layers, seq_len, b_pad, hidden, h_pad, gate_pad

    layers = []
    idx = 0
    for l in range(L):
        if l == 0:
            layers.append((None, None, refs[idx], refs[idx + 1]))
            idx += 2
        else:
            layers.append((refs[idx], refs[idx + 1], refs[idx + 2], refs[idx + 3]))
            idx += 4
    w_fc_ref, b_fc_ref, out_ref, h_col_ref = refs[idx:idx + 4]
    gi_ref = refs[idx + 4] if L > 1 else None

    # Lane mask keeping the hidden state exactly zero beyond lane H (padding
    # invariance; also robust if a nonzero initial state is ever added).
    lane = jax.lax.broadcasted_iota(jnp.int32, (Bp, Hh), 1)
    h_mask = lane < H

    # Full unroll only for short sequences (imem / compile-time blow-up guard).
    unroll = S if S <= 16 else 4

    for l in range(L):
        w_ih_ref, bias_ref, w_hh_ref, b_hh_n_ref = layers[l]

        if l == 0:
            gi_src = gi0_ref          # embedding-fused projection, precomputed
        else:
            # Hoisted input-to-hidden projection for the whole sequence:
            # one big MXU-friendly bf16 matmul with f32 accumulation.
            gi_ref[...] = (
                jnp.dot(h_col_ref[...].astype(jnp.bfloat16), w_ih_ref[...],
                        preferred_element_type=jnp.float32)
                + bias_ref[...])
            gi_src = gi_ref

        w_hh = w_hh_ref[...]                                   # (Hh, G) bf16
        # Hoist the n-gate bias broadcast out of the time loop.
        b_hh_n = jnp.broadcast_to(b_hh_n_ref[...], (Bp, G))    # (Bp, G) f32

        def step(t, h_prev):
            row = pl.multiple_of(t * Bp, Bp)
            gi_t = gi_src[pl.ds(row, Bp), :]                   # (Bp, G) f32
            gh = (jnp.dot(h_prev.astype(jnp.bfloat16), w_hh,
                          preferred_element_type=jnp.float32)
                  + b_hh_n)                                    # (Bp, G) f32
            # Packed pre-activations: r @ [0,H), z @ [H,2H), (junk elsewhere).
            sig = jax.nn.sigmoid(gi_t + gh)
            # Align r onto the n-gate lanes via the (idle) XLU.
            r_n = pltpu.roll(sig, shift=2 * H, axis=1)         # r -> [2H,3H)
            n_all = jnp.tanh(gi_t + r_n * gh)                  # n @ [2H,3H)
            z = pltpu.roll(sig, shift=G - H, axis=1)[:, :Hh]       # z -> [0,H)
            n = pltpu.roll(n_all, shift=G - 2 * H, axis=1)[:, :Hh]  # n -> [0,H)
            h_new = (1.0 - z) * n + z * h_prev
            h_new = jnp.where(h_mask, h_new, 0.0)
            h_col_ref[pl.ds(row, Bp), :] = h_new
            return h_new

        h0 = jnp.zeros((Bp, Hh), jnp.float32)   # hidden = zeros in the module
        jax.lax.fori_loop(0, S, step, h0, unroll=unroll)

    # One big lane-dense FC over all (time, batch) rows.
    out_ref[...] = (
        jnp.dot(h_col_ref[...].astype(jnp.bfloat16), w_fc_ref[...],
                preferred_element_type=jnp.float32)
        + b_fc_ref[...])


def gru_net_forward(tokens, params, *, num_layers, hidden_size, num_class):
    emb_table = params["embedding"]                    # (V, E) f32
    B, S = tokens.shape
    H, C = hidden_size, num_class

    Bp = _round_up(B, 8)           # sublane-aligned batch
    Hh = _round_up(H, 128)         # lane-aligned hidden
    G = _round_up(3 * H, 128)      # packed r|z|n gate lanes
    Cp = _round_up(C, 128)         # lane-dense output slab

    # ---- layer 0: fuse embedding lookup with the input projection ----------
    # table[v] = emb[v] @ W_ih_0^T + b_ih_0 + (r/z parts of b_hh_0)   (exact)
    w_ih0 = params["w_ih_0"]
    b_hh0 = params["b_hh_0"]
    b_fold0 = params["b_ih_0"] + b_hh0.at[2 * H:].set(0.0)
    table = emb_table @ w_ih0.T + b_fold0              # (V, 3H) f32
    gi0 = table[tokens]                                # (B, S, 3H) gather
    gi0 = jnp.transpose(gi0, (1, 0, 2))                # time-major (S, B, 3H)
    gi0 = _pad_to(_pad_to(gi0, 1, Bp), 2, G).reshape(S * Bp, G)

    kernel_inputs = [gi0]
    in_specs = [_full_spec(gi0.shape)]

    def add(x):
        kernel_inputs.append(x)
        in_specs.append(_full_spec(x.shape))

    for l in range(num_layers):
        w_hh = params[f"w_hh_{l}"]                     # (3H, in) PyTorch layout
        b_hh = params[f"b_hh_{l}"]
        if l > 0:
            w_ih = params[f"w_ih_{l}"]
            b_fold = params[f"b_ih_{l}"] + b_hh.at[2 * H:].set(0.0)
            add(_pad_to(_pad_to(w_ih.T, 0, Hh), 1, G).astype(jnp.bfloat16))
            add(_pad_to(b_fold, 0, G).reshape(1, G))
        add(_pad_to(_pad_to(w_hh.T, 0, Hh), 1, G).astype(jnp.bfloat16))
        b_hh_n = jnp.zeros((3 * H,), jnp.float32).at[2 * H:].set(b_hh[2 * H:])
        add(_pad_to(b_hh_n, 0, G).reshape(1, G))

    add(_pad_to(_pad_to(params["fc_w"].T, 0, Hh), 1, Cp).astype(jnp.bfloat16))
    add(_pad_to(params["fc_b"], 0, Cp).reshape(1, Cp))

    scratch_shapes = [pltpu.VMEM((S * Bp, Hh), jnp.float32)]   # layer outputs
    if num_layers > 1:
        scratch_shapes.append(pltpu.VMEM((S * Bp, G), jnp.float32))  # gi buffer

    # Size the scoped VMEM request to actual residency (+ margin).
    total = sum(math.prod(x.shape) * x.dtype.itemsize for x in kernel_inputs)
    total += S * Bp * Cp * 4                            # output slab
    total += S * Bp * Hh * 4                            # h_col scratch
    if num_layers > 1:
        total += S * Bp * G * 4                         # gi scratch
    vmem_limit = int(max(4 << 20, min(100 << 20, 2 * total + (1 << 20))))

    kernel = functools.partial(_gru_net_kernel, num_layers, S, Bp, H, Hh, G)

    out_p = pl.pallas_call(
        kernel,
        out_shape=jax.ShapeDtypeStruct((S * Bp, Cp), jnp.float32),
        in_specs=in_specs,
        out_specs=_full_spec((S * Bp, Cp)),
        scratch_shapes=scratch_shapes,
        compiler_params=pltpu.CompilerParams(vmem_limit_bytes=vmem_limit),
    )(*kernel_inputs)

    # Strip padding, back to batch-first, then x.view(-1, num_class).
    out = out_p.reshape(S, Bp, Cp)[:, :B, :C]           # (S, B, C)
    out = jnp.transpose(out, (1, 0, 2))                 # (B, S, C)
    return out.reshape(-1, C)


def gru_net_reference(tokens, params, *, num_layers, hidden_size, num_class):
    """Pure-JAX f32 reference mirroring torch semantics, for validation."""
    emb = params["embedding"][tokens]                   # (B, S, E)
    B, S, _ = emb.shape
    H = hidden_size
    x = emb
    for l in range(num_layers):
        w_ih = params[f"w_ih_{l}"]
        w_hh = params[f"w_hh_{l}"]
        b_ih = params[f"b_ih_{l}"]
        b_hh = params[f"b_hh_{l}"]

        def step(h, xt):
            gi = xt @ w_ih.T + b_ih
            gh = h @ w_hh.T + b_hh
            r = jax.nn.sigmoid(gi[:, :H] + gh[:, :H])
            z = jax.nn.sigmoid(gi[:, H:2 * H] + gh[:, H:2 * H])
            n = jnp.tanh(gi[:, 2 * H:] + r * gh[:, 2 * H:])
            h_new = (1.0 - z) * n + z * h
            return h_new, h_new

        _, ys = jax.lax.scan(step, jnp.zeros((B, H), jnp.float32),
                             jnp.transpose(x, (1, 0, 2)))
        x = jnp.transpose(ys, (1, 0, 2))
    out = x @ params["fc_w"].T + params["fc_b"]
    return out.reshape(-1, num_class)


def init_params(key, *, input_size, embding_size, hidden_size, num_layers,
                num_class):
    params = {}
    k = key
    k, sub = jax.random.split(k)
    params["embedding"] = jax.random.normal(
        sub, (input_size, embding_size), jnp.float32)
    bound = 1.0 / jnp.sqrt(hidden_size)
    for l in range(num_layers):
        in_dim = embding_size if l == 0 else hidden_size
        k, k1, k2, k3, k4 = jax.random.split(k, 5)
        params[f"w_ih_{l}"] = jax.random.uniform(
            k1, (3 * hidden_size, in_dim), jnp.float32, -bound, bound)
        params[f"w_hh_{l}"] = jax.random.uniform(
            k2, (3 * hidden_size, hidden_size), jnp.float32, -bound, bound)
        params[f"b_ih_{l}"] = jax.random.uniform(
            k3, (3 * hidden_size,), jnp.float32, -bound, bound)
        params[f"b_hh_{l}"] = jax.random.uniform(
            k4, (3 * hidden_size,), jnp.float32, -bound, bound)
    k, k1, k2 = jax.random.split(k, 3)
    fbound = 1.0 / jnp.sqrt(hidden_size)
    params["fc_w"] = jax.random.uniform(
        k1, (num_class, hidden_size), jnp.float32, -fbound, fbound)
    params["fc_b"] = jax.random.uniform(
        k2, (num_class,), jnp.float32, -fbound, fbound)
    return params


if __name__ == "__main__":
    INPUT_SIZE = 20    # vocab
    EMB = 16
    HIDDEN = 32
    BATCH = 4
    LAYERS = 2
    NUM_CLASS = 8
    SEQ = 8

    key = jax.random.PRNGKey(0)
    key, pkey, tkey = jax.random.split(key, 3)
    params = init_params(pkey, input_size=INPUT_SIZE, embding_size=EMB,
                         hidden_size=HIDDEN, num_layers=LAYERS,
                         num_class=NUM_CLASS)
    tokens = jax.random.randint(tkey, (BATCH, SEQ), 0, INPUT_SIZE,
                                dtype=jnp.int32)

    out = gru_net_forward(tokens, params, num_layers=LAYERS,
                          hidden_size=HIDDEN, num_class=NUM_CLASS)
    out = jax.block_until_ready(out)

    ref = gru_net_reference(tokens, params, num_layers=LAYERS,
                            hidden_size=HIDDEN, num_class=NUM_CLASS)
    assert out.shape == (BATCH * SEQ, NUM_CLASS), out.shape
    # bf16 matmul inputs (f32 accumulation) vs. f32 reference -> loose check.
    max_err = float(jnp.max(jnp.abs(out - ref)))
    assert max_err < 5e-2, max_err
    print("KERNEL_OK")
</pallas_src>

<mosaic_0001>
module attributes {stable_mosaic.version = 11 : i64} {
  func.func @_gru_net_kernel(%arg0: memref<64x128xf32, #tpu.memory_space<vmem>>, %arg1: memref<128x128xbf16, #tpu.memory_space<vmem>>, %arg2: memref<1x128xf32, #tpu.memory_space<vmem>>, %arg3: memref<128x128xbf16, #tpu.memory_space<vmem>>, %arg4: memref<1x128xf32, #tpu.memory_space<vmem>>, %arg5: memref<128x128xbf16, #tpu.memory_space<vmem>>, %arg6: memref<1x128xf32, #tpu.memory_space<vmem>>, %arg7: memref<128x128xbf16, #tpu.memory_space<vmem>>, %arg8: memref<1x128xf32, #tpu.memory_space<vmem>>, %arg9: memref<64x128xf32, #tpu.memory_space<vmem>>, %arg10: memref<64x128xf32, #tpu.memory_space<vmem>>, %arg11: memref<64x128xf32, #tpu.memory_space<vmem>>) attributes {dimension_semantics = [], scalar_prefetch = 0 : i64, scratch_operands = 2 : i64, tpu.core_type = #tpu.core_type<tc>} {
    %0 = tpu.iota {dimensions = array<i32: 1>} : vector<8x128xi32>
    %c32_i32 = arith.constant 32 : i32
    %1 = vector.broadcast %c32_i32 : i32 to vector<8x128xi32>
    %2 = arith.cmpi slt, %0, %1 : vector<8x128xi32>
    %c0 = arith.constant 0 : index
    %c0_0 = arith.constant 0 : index
    %3 = vector.load %arg1[%c0, %c0_0] : memref<128x128xbf16, #tpu.memory_space<vmem>>, vector<128x128xbf16>
    %c0_1 = arith.constant 0 : index
    %c0_2 = arith.constant 0 : index
    %4 = vector.load %arg2[%c0_1, %c0_2] : memref<1x128xf32, #tpu.memory_space<vmem>>, vector<1x128xf32>
    %5 = vector.shape_cast %4 : vector<1x128xf32> to vector<1x128xf32>
    %6 = vector.broadcast %5 : vector<1x128xf32> to vector<8x128xf32>
    %cst = arith.constant 0.000000e+00 : f32
    %7 = vector.broadcast %cst : f32 to vector<8x128xf32>
    %c0_i32 = arith.constant 0 : i32
    %c8_i32 = arith.constant 8 : i32
    %8 = arith.muli %c0_i32, %c8_i32 : i32
    %9 = tpu.assume_multiple %8, 8 : i32
    %10 = arith.index_cast %9 : i32 to index
    %c0_3 = arith.constant 0 : index
    %11 = vector.load %arg0[%10, %c0_3] : memref<64x128xf32, #tpu.memory_space<vmem>>, vector<8x128xf32>
    %12 = arith.truncf %7 : vector<8x128xf32> to vector<8x128xbf16>
    %cst_4 = arith.constant dense<0.000000e+00> : vector<8x128xf32>
    %13 = tpu.matmul %12, %3, %cst_4 {dimension_numbers = #tpu.dot_dimension_numbers<[1], [0], [0], [1], [0, 0, 1, 1], [], []>} : vector<8x128xbf16>, vector<128x128xbf16>, vector<8x128xf32> -> vector<8x128xf32>
    %14 = arith.addf %13, %6 : vector<8x128xf32>
    %15 = arith.addf %11, %14 : vector<8x128xf32>
    %16 = arith.negf %15 : vector<8x128xf32>
    %17 = math.exp %16 : vector<8x128xf32>
    %cst_5 = arith.constant 1.000000e+00 : f32
    %18 = vector.broadcast %cst_5 : f32 to vector<8x128xf32>
    %19 = arith.addf %18, %17 : vector<8x128xf32>
    %20 = arith.divf %18, %19 : vector<8x128xf32>
    %c64_i32 = arith.constant 64 : i32
    %21 = tpu.dynamic_rotate %20 by %c64_i32 dim 1 : vector<8x128xf32>, i32 -> vector<8x128xf32>
    %22 = arith.mulf %21, %14 : vector<8x128xf32>
    %23 = arith.addf %11, %22 : vector<8x128xf32>
    %24 = math.tanh %23 : vector<8x128xf32>
    %c96_i32 = arith.constant 96 : i32
    %25 = tpu.dynamic_rotate %20 by %c96_i32 dim 1 : vector<8x128xf32>, i32 -> vector<8x128xf32>
    %c64_i32_6 = arith.constant 64 : i32
    %26 = tpu.dynamic_rotate %24 by %c64_i32_6 dim 1 : vector<8x128xf32>, i32 -> vector<8x128xf32>
    %cst_7 = arith.constant 1.000000e+00 : f32
    %27 = vector.broadcast %cst_7 : f32 to vector<8x128xf32>
    %28 = arith.subf %27, %25 : vector<8x128xf32>
    %29 = arith.mulf %28, %26 : vector<8x128xf32>
    %30 = arith.mulf %25, %7 : vector<8x128xf32>
    %31 = arith.addf %29, %30 : vector<8x128xf32>
    %cst_8 = arith.constant 0.000000e+00 : f32
    %32 = vector.broadcast %cst_8 : f32 to vector<8x128xf32>
    %33 = arith.select %2, %31, %32 : vector<8x128xi1>, vector<8x128xf32>
    %34 = arith.index_cast %9 : i32 to index
    %c0_9 = arith.constant 0 : index
    %35 = vector.load %arg10[%34, %c0_9] : memref<64x128xf32, #tpu.memory_space<vmem>>, vector<8x128xf32>
    tpu.vector_store %arg10[%34, %c0_9], %33 {strides = array<i32>} : memref<64x128xf32, #tpu.memory_space<vmem>>, vector<8x128xf32>,
    %c1_i32 = arith.constant 1 : i32
    %c8_i32_10 = arith.constant 8 : i32
    %36 = arith.muli %c1_i32, %c8_i32_10 : i32
    %37 = tpu.assume_multiple %36, 8 : i32
    %38 = arith.index_cast %37 : i32 to index
    %c0_11 = arith.constant 0 : index
    %39 = vector.load %arg0[%38, %c0_11] : memref<64x128xf32, #tpu.memory_space<vmem>>, vector<8x128xf32>
    %40 = arith.truncf %33 : vector<8x128xf32> to vector<8x128xbf16>
    %cst_12 = arith.constant dense<0.000000e+00> : vector<8x128xf32>
    %41 = tpu.matmul %40, %3, %cst_12 {dimension_numbers = #tpu.dot_dimension_numbers<[1], [0], [0], [1], [0, 0, 1, 1], [], []>} : vector<8x128xbf16>, vector<128x128xbf16>, vector<8x128xf32> -> vector<8x128xf32>
    %42 = arith.addf %41, %6 : vector<8x128xf32>
    %43 = arith.addf %39, %42 : vector<8x128xf32>
    %44 = arith.negf %43 : vector<8x128xf32>
    %45 = math.exp %44 : vector<8x128xf32>
    %cst_13 = arith.constant 1.000000e+00 : f32
    %46 = vector.broadcast %cst_13 : f32 to vector<8x128xf32>
    %47 = arith.addf %46, %45 : vector<8x128xf32>
    %48 = arith.divf %46, %47 : vector<8x128xf32>
    %c64_i32_14 = arith.constant 64 : i32
    %49 = tpu.dynamic_rotate %48 by %c64_i32_14 dim 1 : vector<8x128xf32>, i32 -> vector<8x128xf32>
    %50 = arith.mulf %49, %42 : vector<8x128xf32>
    %51 = arith.addf %39, %50 : vector<8x128xf32>
    %52 = math.tanh %51 : vector<8x128xf32>
    %c96_i32_15 = arith.constant 96 : i32
    %53 = tpu.dynamic_rotate %48 by %c96_i32_15 dim 1 : vector<8x128xf32>, i32 -> vector<8x128xf32>
    %c64_i32_16 = arith.constant 64 : i32
    %54 = tpu.dynamic_rotate %52 by %c64_i32_16 dim 1 : vector<8x128xf32>, i32 -> vector<8x128xf32>
    %cst_17 = arith.constant 1.000000e+00 : f32
    %55 = vector.broadcast %cst_17 : f32 to vector<8x128xf32>
    %56 = arith.subf %55, %53 : vector<8x128xf32>
    %57 = arith.mulf %56, %54 : vector<8x128xf32>
    %58 = arith.mulf %53, %33 : vector<8x128xf32>
    %59 = arith.addf %57, %58 : vector<8x128xf32>
    %cst_18 = arith.constant 0.000000e+00 : f32
    %60 = vector.broadcast %cst_18 : f32 to vector<8x128xf32>
    %61 = arith.select %2, %59, %60 : vector<8x128xi1>, vector<8x128xf32>
    %62 = arith.index_cast %37 : i32 to index
    %c0_19 = arith.constant 0 : index
    %63 = vector.load %arg10[%62, %c0_19] : memref<64x128xf32, #tpu.memory_space<vmem>>, vector<8x128xf32>
    tpu.vector_store %arg10[%62, %c0_19], %61 {strides = array<i32>} : memref<64x128xf32, #tpu.memory_space<vmem>>, vector<8x128xf32>,
    %c2_i32 = arith.constant 2 : i32
    %c8_i32_20 = arith.constant 8 : i32
    %64 = arith.muli %c2_i32, %c8_i32_20 : i32
    %65 = tpu.assume_multiple %64, 8 : i32
    %66 = arith.index_cast %65 : i32 to index
    %c0_21 = arith.constant 0 : index
    %67 = vector.load %arg0[%66, %c0_21] : memref<64x128xf32, #tpu.memory_space<vmem>>, vector<8x128xf32>
    %68 = arith.truncf %61 : vector<8x128xf32> to vector<8x128xbf16>
    %cst_22 = arith.constant dense<0.000000e+00> : vector<8x128xf32>
    %69 = tpu.matmul %68, %3, %cst_22 {dimension_numbers = #tpu.dot_dimension_numbers<[1], [0], [0], [1], [0, 0, 1, 1], [], []>} : vector<8x128xbf16>, vector<128x128xbf16>, vector<8x128xf32> -> vector<8x128xf32>
    %70 = arith.addf %69, %6 : vector<8x128xf32>
    %71 = arith.addf %67, %70 : vector<8x128xf32>
    %72 = arith.negf %71 : vector<8x128xf32>
    %73 = math.exp %72 : vector<8x128xf32>
    %cst_23 = arith.constant 1.000000e+00 : f32
    %74 = vector.broadcast %cst_23 : f32 to vector<8x128xf32>
    %75 = arith.addf %74, %73 : vector<8x128xf32>
    %76 = arith.divf %74, %75 : vector<8x128xf32>
    %c64_i32_24 = arith.constant 64 : i32
    %77 = tpu.dynamic_rotate %76 by %c64_i32_24 dim 1 : vector<8x128xf32>, i32 -> vector<8x128xf32>
    %78 = arith.mulf %77, %70 : vector<8x128xf32>
    %79 = arith.addf %67, %78 : vector<8x128xf32>
    %80 = math.tanh %79 : vector<8x128xf32>
    %c96_i32_25 = arith.constant 96 : i32
    %81 = tpu.dynamic_rotate %76 by %c96_i32_25 dim 1 : vector<8x128xf32>, i32 -> vector<8x128xf32>
    %c64_i32_26 = arith.constant 64 : i32
    %82 = tpu.dynamic_rotate %80 by %c64_i32_26 dim 1 : vector<8x128xf32>, i32 -> vector<8x128xf32>
    %cst_27 = arith.constant 1.000000e+00 : f32
    %83 = vector.broadcast %cst_27 : f32 to vector<8x128xf32>
    %84 = arith.subf %83, %81 : vector<8x128xf32>
    %85 = arith.mulf %84, %82 : vector<8x128xf32>
    %86 = arith.mulf %81, %61 : vector<8x128xf32>
    %87 = arith.addf %85, %86 : vector<8x128xf32>
    %cst_28 = arith.constant 0.000000e+00 : f32
    %88 = vector.broadcast %cst_28 : f32 to vector<8x128xf32>
    %89 = arith.select %2, %87, %88 : vector<8x128xi1>, vector<8x128xf32>
    %90 = arith.index_cast %65 : i32 to index
    %c0_29 = arith.constant 0 : index
    %91 = vector.load %arg10[%90, %c0_29] : memref<64x128xf32, #tpu.memory_space<vmem>>, vector<8x128xf32>
    tpu.vector_store %arg10[%90, %c0_29], %89 {strides = array<i32>} : memref<64x128xf32, #tpu.memory_space<vmem>>, vector<8x128xf32>,
    %c3_i32 = arith.constant 3 : i32
    %c8_i32_30 = arith.constant 8 : i32
    %92 = arith.muli %c3_i32, %c8_i32_30 : i32
    %93 = tpu.assume_multiple %92, 8 : i32
    %94 = arith.index_cast %93 : i32 to index
    %c0_31 = arith.constant 0 : index
    %95 = vector.load %arg0[%94, %c0_31] : memref<64x128xf32, #tpu.memory_space<vmem>>, vector<8x128xf32>
    %96 = arith.truncf %89 : vector<8x128xf32> to vector<8x128xbf16>
    %cst_32 = arith.constant dense<0.000000e+00> : vector<8x128xf32>
    %97 = tpu.matmul %96, %3, %cst_32 {dimension_numbers = #tpu.dot_dimension_numbers<[1], [0], [0], [1], [0, 0, 1, 1], [], []>} : vector<8x128xbf16>, vector<128x128xbf16>, vector<8x128xf32> -> vector<8x128xf32>
    %98 = arith.addf %97, %6 : vector<8x128xf32>
    %99 = arith.addf %95, %98 : vector<8x128xf32>
    %100 = arith.negf %99 : vector<8x128xf32>
    %101 = math.exp %100 : vector<8x128xf32>
    %cst_33 = arith.constant 1.000000e+00 : f32
    %102 = vector.broadcast %cst_33 : f32 to vector<8x128xf32>
    %103 = arith.addf %102, %101 : vector<8x128xf32>
    %104 = arith.divf %102, %103 : vector<8x128xf32>
    %c64_i32_34 = arith.constant 64 : i32
    %105 = tpu.dynamic_rotate %104 by %c64_i32_34 dim 1 : vector<8x128xf32>, i32 -> vector<8x128xf32>
    %106 = arith.mulf %105, %98 : vector<8x128xf32>
    %107 = arith.addf %95, %106 : vector<8x128xf32>
    %108 = math.tanh %107 : vector<8x128xf32>
    %c96_i32_35 = arith.constant 96 : i32
    %109 = tpu.dynamic_rotate %104 by %c96_i32_35 dim 1 : vector<8x128xf32>, i32 -> vector<8x128xf32>
    %c64_i32_36 = arith.constant 64 : i32
    %110 = tpu.dynamic_rotate %108 by %c64_i32_36 dim 1 : vector<8x128xf32>, i32 -> vector<8x128xf32>
    %cst_37 = arith.constant 1.000000e+00 : f32
    %111 = vector.broadcast %cst_37 : f32 to vector<8x128xf32>
    %112 = arith.subf %111, %109 : vector<8x128xf32>
    %113 = arith.mulf %112, %110 : vector<8x128xf32>
    %114 = arith.mulf %109, %89 : vector<8x128xf32>
    %115 = arith.addf %113, %114 : vector<8x128xf32>
    %cst_38 = arith.constant 0.000000e+00 : f32
    %116 = vector.broadcast %cst_38 : f32 to vector<8x128xf32>
    %117 = arith.select %2, %115, %116 : vector<8x128xi1>, vector<8x128xf32>
    %118 = arith.index_cast %93 : i32 to index
    %c0_39 = arith.constant 0 : index
    %119 = vector.load %arg10[%118, %c0_39] : memref<64x128xf32, #tpu.memory_space<vmem>>, vector<8x128xf32>
    tpu.vector_store %arg10[%118, %c0_39], %117 {strides = array<i32>} : memref<64x128xf32, #tpu.memory_space<vmem>>, vector<8x128xf32>,
    %c4_i32 = arith.constant 4 : i32
    %c8_i32_40 = arith.constant 8 : i32
    %120 = arith.muli %c4_i32, %c8_i32_40 : i32
    %121 = tpu.assume_multiple %120, 8 : i32
    %122 = arith.index_cast %121 : i32 to index
    %c0_41 = arith.constant 0 : index
    %123 = vector.load %arg0[%122, %c0_41] : memref<64x128xf32, #tpu.memory_space<vmem>>, vector<8x128xf32>
    %124 = arith.truncf %117 : vector<8x128xf32> to vector<8x128xbf16>
    %cst_42 = arith.constant dense<0.000000e+00> : vector<8x128xf32>
    %125 = tpu.matmul %124, %3, %cst_42 {dimension_numbers = #tpu.dot_dimension_numbers<[1], [0], [0], [1], [0, 0, 1, 1], [], []>} : vector<8x128xbf16>, vector<128x128xbf16>, vector<8x128xf32> -> vector<8x128xf32>
    %126 = arith.addf %125, %6 : vector<8x128xf32>
    %127 = arith.addf %123, %126 : vector<8x128xf32>
    %128 = arith.negf %127 : vector<8x128xf32>
    %129 = math.exp %128 : vector<8x128xf32>
    %cst_43 = arith.constant 1.000000e+00 : f32
    %130 = vector.broadcast %cst_43 : f32 to vector<8x128xf32>
    %131 = arith.addf %130, %129 : vector<8x128xf32>
    %132 = arith.divf %130, %131 : vector<8x128xf32>
    %c64_i32_44 = arith.constant 64 : i32
    %133 = tpu.dynamic_rotate %132 by %c64_i32_44 dim 1 : vector<8x128xf32>, i32 -> vector<8x128xf32>
    %134 = arith.mulf %133, %126 : vector<8x128xf32>
    %135 = arith.addf %123, %134 : vector<8x128xf32>
    %136 = math.tanh %135 : vector<8x128xf32>
    %c96_i32_45 = arith.constant 96 : i32
    %137 = tpu.dynamic_rotate %132 by %c96_i32_45 dim 1 : vector<8x128xf32>, i32 -> vector<8x128xf32>
    %c64_i32_46 = arith.constant 64 : i32
    %138 = tpu.dynamic_rotate %136 by %c64_i32_46 dim 1 : vector<8x128xf32>, i32 -> vector<8x128xf32>
    %cst_47 = arith.constant 1.000000e+00 : f32
    %139 = vector.broadcast %cst_47 : f32 to vector<8x128xf32>
    %140 = arith.subf %139, %137 : vector<8x128xf32>
    %141 = arith.mulf %140, %138 : vector<8x128xf32>
    %142 = arith.mulf %137, %117 : vector<8x128xf32>
    %143 = arith.addf %141, %142 : vector<8x128xf32>
    %cst_48 = arith.constant 0.000000e+00 : f32
    %144 = vector.broadcast %cst_48 : f32 to vector<8x128xf32>
    %145 = arith.select %2, %143, %144 : vector<8x128xi1>, vector<8x128xf32>
    %146 = arith.index_cast %121 : i32 to index
    %c0_49 = arith.constant 0 : index
    %147 = vector.load %arg10[%146, %c0_49] : memref<64x128xf32, #tpu.memory_space<vmem>>, vector<8x128xf32>
    tpu.vector_store %arg10[%146, %c0_49], %145 {strides = array<i32>} : memref<64x128xf32, #tpu.memory_space<vmem>>, vector<8x128xf32>,
    %c5_i32 = arith.constant 5 : i32
    %c8_i32_50 = arith.constant 8 : i32
    %148 = arith.muli %c5_i32, %c8_i32_50 : i32
    %149 = tpu.assume_multiple %148, 8 : i32
    %150 = arith.index_cast %149 : i32 to index
    %c0_51 = arith.constant 0 : index
    %151 = vector.load %arg0[%150, %c0_51] : memref<64x128xf32, #tpu.memory_space<vmem>>, vector<8x128xf32>
    %152 = arith.truncf %145 : vector<8x128xf32> to vector<8x128xbf16>
    %cst_52 = arith.constant dense<0.000000e+00> : vector<8x128xf32>
    %153 = tpu.matmul %152, %3, %cst_52 {dimension_numbers = #tpu.dot_dimension_numbers<[1], [0], [0], [1], [0, 0, 1, 1], [], []>} : vector<8x128xbf16>, vector<128x128xbf16>, vector<8x128xf32> -> vector<8x128xf32>
    %154 = arith.addf %153, %6 : vector<8x128xf32>
    %155 = arith.addf %151, %154 : vector<8x128xf32>
    %156 = arith.negf %155 : vector<8x128xf32>
    %157 = math.exp %156 : vector<8x128xf32>
    %cst_53 = arith.constant 1.000000e+00 : f32
    %158 = vector.broadcast %cst_53 : f32 to vector<8x128xf32>
    %159 = arith.addf %158, %157 : vector<8x128xf32>
    %160 = arith.divf %158, %159 : vector<8x128xf32>
    %c64_i32_54 = arith.constant 64 : i32
    %161 = tpu.dynamic_rotate %160 by %c64_i32_54 dim 1 : vector<8x128xf32>, i32 -> vector<8x128xf32>
    %162 = arith.mulf %161, %154 : vector<8x128xf32>
    %163 = arith.addf %151, %162 : vector<8x128xf32>
    %164 = math.tanh %163 : vector<8x128xf32>
    %c96_i32_55 = arith.constant 96 : i32
    %165 = tpu.dynamic_rotate %160 by %c96_i32_55 dim 1 : vector<8x128xf32>, i32 -> vector<8x128xf32>
    %c64_i32_56 = arith.constant 64 : i32
    %166 = tpu.dynamic_rotate %164 by %c64_i32_56 dim 1 : vector<8x128xf32>, i32 -> vector<8x128xf32>
    %cst_57 = arith.constant 1.000000e+00 : f32
    %167 = vector.broadcast %cst_57 : f32 to vector<8x128xf32>
    %168 = arith.subf %167, %165 : vector<8x128xf32>
    %169 = arith.mulf %168, %166 : vector<8x128xf32>
    %170 = arith.mulf %165, %145 : vector<8x128xf32>
    %171 = arith.addf %169, %170 : vector<8x128xf32>
    %cst_58 = arith.constant 0.000000e+00 : f32
    %172 = vector.broadcast %cst_58 : f32 to vector<8x128xf32>
    %173 = arith.select %2, %171, %172 : vector<8x128xi1>, vector<8x128xf32>
    %174 = arith.index_cast %149 : i32 to index
    %c0_59 = arith.constant 0 : index
    %175 = vector.load %arg10[%174, %c0_59] : memref<64x128xf32, #tpu.memory_space<vmem>>, vector<8x128xf32>
    tpu.vector_store %arg10[%174, %c0_59], %173 {strides = array<i32>} : memref<64x128xf32, #tpu.memory_space<vmem>>, vector<8x128xf32>,
    %c6_i32 = arith.constant 6 : i32
    %c8_i32_60 = arith.constant 8 : i32
    %176 = arith.muli %c6_i32, %c8_i32_60 : i32
    %177 = tpu.assume_multiple %176, 8 : i32
    %178 = arith.index_cast %177 : i32 to index
    %c0_61 = arith.constant 0 : index
    %179 = vector.load %arg0[%178, %c0_61] : memref<64x128xf32, #tpu.memory_space<vmem>>, vector<8x128xf32>
    %180 = arith.truncf %173 : vector<8x128xf32> to vector<8x128xbf16>
    %cst_62 = arith.constant dense<0.000000e+00> : vector<8x128xf32>
    %181 = tpu.matmul %180, %3, %cst_62 {dimension_numbers = #tpu.dot_dimension_numbers<[1], [0], [0], [1], [0, 0, 1, 1], [], []>} : vector<8x128xbf16>, vector<128x128xbf16>, vector<8x128xf32> -> vector<8x128xf32>
    %182 = arith.addf %181, %6 : vector<8x128xf32>
    %183 = arith.addf %179, %182 : vector<8x128xf32>
    %184 = arith.negf %183 : vector<8x128xf32>
    %185 = math.exp %184 : vector<8x128xf32>
    %cst_63 = arith.constant 1.000000e+00 : f32
    %186 = vector.broadcast %cst_63 : f32 to vector<8x128xf32>
    %187 = arith.addf %186, %185 : vector<8x128xf32>
    %188 = arith.divf %186, %187 : vector<8x128xf32>
    %c64_i32_64 = arith.constant 64 : i32
    %189 = tpu.dynamic_rotate %188 by %c64_i32_64 dim 1 : vector<8x128xf32>, i32 -> vector<8x128xf32>
    %190 = arith.mulf %189, %182 : vector<8x128xf32>
    %191 = arith.addf %179, %190 : vector<8x128xf32>
    %192 = math.tanh %191 : vector<8x128xf32>
    %c96_i32_65 = arith.constant 96 : i32
    %193 = tpu.dynamic_rotate %188 by %c96_i32_65 dim 1 : vector<8x128xf32>, i32 -> vector<8x128xf32>
    %c64_i32_66 = arith.constant 64 : i32
    %194 = tpu.dynamic_rotate %192 by %c64_i32_66 dim 1 : vector<8x128xf32>, i32 -> vector<8x128xf32>
    %cst_67 = arith.constant 1.000000e+00 : f32
    %195 = vector.broadcast %cst_67 : f32 to vector<8x128xf32>
    %196 = arith.subf %195, %193 : vector<8x128xf32>
    %197 = arith.mulf %196, %194 : vector<8x128xf32>
    %198 = arith.mulf %193, %173 : vector<8x128xf32>
    %199 = arith.addf %197, %198 : vector<8x128xf32>
    %cst_68 = arith.constant 0.000000e+00 : f32
    %200 = vector.broadcast %cst_68 : f32 to vector<8x128xf32>
    %201 = arith.select %2, %199, %200 : vector<8x128xi1>, vector<8x128xf32>
    %202 = arith.index_cast %177 : i32 to index
    %c0_69 = arith.constant 0 : index
    %203 = vector.load %arg10[%202, %c0_69] : memref<64x128xf32, #tpu.memory_space<vmem>>, vector<8x128xf32>
    tpu.vector_store %arg10[%202, %c0_69], %201 {strides = array<i32>} : memref<64x128xf32, #tpu.memory_space<vmem>>, vector<8x128xf32>,
    %c7_i32 = arith.constant 7 : i32
    %c8_i32_70 = arith.constant 8 : i32
    %204 = arith.muli %c7_i32, %c8_i32_70 : i32
    %205 = tpu.assume_multiple %204, 8 : i32
    %206 = arith.index_cast %205 : i32 to index
    %c0_71 = arith.constant 0 : index
    %207 = vector.load %arg0[%206, %c0_71] : memref<64x128xf32, #tpu.memory_space<vmem>>, vector<8x128xf32>
    %208 = arith.truncf %201 : vector<8x128xf32> to vector<8x128xbf16>
    %cst_72 = arith.constant dense<0.000000e+00> : vector<8x128xf32>
    %209 = tpu.matmul %208, %3, %cst_72 {dimension_numbers = #tpu.dot_dimension_numbers<[1], [0], [0], [1], [0, 0, 1, 1], [], []>} : vector<8x128xbf16>, vector<128x128xbf16>, vector<8x128xf32> -> vector<8x128xf32>
    %210 = arith.addf %209, %6 : vector<8x128xf32>
    %211 = arith.addf %207, %210 : vector<8x128xf32>
    %212 = arith.negf %211 : vector<8x128xf32>
    %213 = math.exp %212 : vector<8x128xf32>
    %cst_73 = arith.constant 1.000000e+00 : f32
    %214 = vector.broadcast %cst_73 : f32 to vector<8x128xf32>
    %215 = arith.addf %214, %213 : vector<8x128xf32>
    %216 = arith.divf %214, %215 : vector<8x128xf32>
    %c64_i32_74 = arith.constant 64 : i32
    %217 = tpu.dynamic_rotate %216 by %c64_i32_74 dim 1 : vector<8x128xf32>, i32 -> vector<8x128xf32>
    %218 = arith.mulf %217, %210 : vector<8x128xf32>
    %219 = arith.addf %207, %218 : vector<8x128xf32>
    %220 = math.tanh %219 : vector<8x128xf32>
    %c96_i32_75 = arith.constant 96 : i32
    %221 = tpu.dynamic_rotate %216 by %c96_i32_75 dim 1 : vector<8x128xf32>, i32 -> vector<8x128xf32>
    %c64_i32_76 = arith.constant 64 : i32
    %222 = tpu.dynamic_rotate %220 by %c64_i32_76 dim 1 : vector<8x128xf32>, i32 -> vector<8x128xf32>
    %cst_77 = arith.constant 1.000000e+00 : f32
    %223 = vector.broadcast %cst_77 : f32 to vector<8x128xf32>
    %224 = arith.subf %223, %221 : vector<8x128xf32>
    %225 = arith.mulf %224, %222 : vector<8x128xf32>
    %226 = arith.mulf %221, %201 : vector<8x128xf32>
    %227 = arith.addf %225, %226 : vector<8x128xf32>
    %cst_78 = arith.constant 0.000000e+00 : f32
    %228 = vector.broadcast %cst_78 : f32 to vector<8x128xf32>
    %229 = arith.select %2, %227, %228 : vector<8x128xi1>, vector<8x128xf32>
    %230 = arith.index_cast %205 : i32 to index
    %c0_79 = arith.constant 0 : index
    %231 = vector.load %arg10[%230, %c0_79] : memref<64x128xf32, #tpu.memory_space<vmem>>, vector<8x128xf32>
    tpu.vector_store %arg10[%230, %c0_79], %229 {strides = array<i32>} : memref<64x128xf32, #tpu.memory_space<vmem>>, vector<8x128xf32>,
    %c8_i32_80 = arith.constant 8 : i32
    %c0_81 = arith.constant 0 : index
    %c0_82 = arith.constant 0 : index
    %232 = vector.load %arg10[%c0_81, %c0_82] : memref<64x128xf32, #tpu.memory_space<vmem>>, vector<64x128xf32>
    %233 = arith.truncf %232 : vector<64x128xf32> to vector<64x128xbf16>
    %c0_83 = arith.constant 0 : index
    %c0_84 = arith.constant 0 : index
    %234 = vector.load %arg3[%c0_83, %c0_84] : memref<128x128xbf16, #tpu.memory_space<vmem>>, vector<128x128xbf16>
    %cst_85 = arith.constant dense<0.000000e+00> : vector<64x128xf32>
    %235 = tpu.matmul %233, %234, %cst_85 {dimension_numbers = #tpu.dot_dimension_numbers<[1], [0], [0], [1], [0, 0, 1, 1], [], []>} : vector<64x128xbf16>, vector<128x128xbf16>, vector<64x128xf32> -> vector<64x128xf32>
    %c0_86 = arith.constant 0 : index
    %c0_87 = arith.constant 0 : index
    %236 = vector.load %arg4[%c0_86, %c0_87] : memref<1x128xf32, #tpu.memory_space<vmem>>, vector<1x128xf32>
    %237 = vector.broadcast %236 : vector<1x128xf32> to vector<64x128xf32>
    %238 = arith.addf %235, %237 : vector<64x128xf32>
    %c0_88 = arith.constant 0 : index
    %c0_89 = arith.constant 0 : index
    %239 = vector.load %arg11[%c0_88, %c0_89] : memref<64x128xf32, #tpu.memory_space<vmem>>, vector<64x128xf32>
    tpu.vector_store %arg11[%c0_88, %c0_89], %238 {strides = array<i32>} : memref<64x128xf32, #tpu.memory_space<vmem>>, vector<64x128xf32>,
    %c0_90 = arith.constant 0 : index
    %c0_91 = arith.constant 0 : index
    %240 = vector.load %arg5[%c0_90, %c0_91] : memref<128x128xbf16, #tpu.memory_space<vmem>>, vector<128x128xbf16>
    %c0_92 = arith.constant 0 : index
    %c0_93 = arith.constant 0 : index
    %241 = vector.load %arg6[%c0_92, %c0_93] : memref<1x128xf32, #tpu.memory_space<vmem>>, vector<1x128xf32>
    %242 = vector.shape_cast %241 : vector<1x128xf32> to vector<1x128xf32>
    %243 = vector.broadcast %242 : vector<1x128xf32> to vector<8x128xf32>
    %cst_94 = arith.constant 0.000000e+00 : f32
    %244 = vector.broadcast %cst_94 : f32 to vector<8x128xf32>
    %c0_i32_95 = arith.constant 0 : i32
    %c8_i32_96 = arith.constant 8 : i32
    %245 = arith.muli %c0_i32_95, %c8_i32_96 : i32
    %246 = tpu.assume_multiple %245, 8 : i32
    %247 = arith.index_cast %246 : i32 to index
    %c0_97 = arith.constant 0 : index
    %248 = vector.load %arg11[%247, %c0_97] : memref<64x128xf32, #tpu.memory_space<vmem>>, vector<8x128xf32>
    %249 = arith.truncf %244 : vector<8x128xf32> to vector<8x128xbf16>
    %cst_98 = arith.constant dense<0.000000e+00> : vector<8x128xf32>
    %250 = tpu.matmul %249, %240, %cst_98 {dimension_numbers = #tpu.dot_dimension_numbers<[1], [0], [0], [1], [0, 0, 1, 1], [], []>} : vector<8x128xbf16>, vector<128x128xbf16>, vector<8x128xf32> -> vector<8x128xf32>
    %251 = arith.addf %250, %243 : vector<8x128xf32>
    %252 = arith.addf %248, %251 : vector<8x128xf32>
    %253 = arith.negf %252 : vector<8x128xf32>
    %254 = math.exp %253 : vector<8x128xf32>
    %cst_99 = arith.constant 1.000000e+00 : f32
    %255 = vector.broadcast %cst_99 : f32 to vector<8x128xf32>
    %256 = arith.addf %255, %254 : vector<8x128xf32>
    %257 = arith.divf %255, %256 : vector<8x128xf32>
    %c64_i32_100 = arith.constant 64 : i32
    %258 = tpu.dynamic_rotate %257 by %c64_i32_100 dim 1 : vector<8x128xf32>, i32 -> vector<8x128xf32>
    %259 = arith.mulf %258, %251 : vector<8x128xf32>
    %260 = arith.addf %248, %259 : vector<8x128xf32>
    %261 = math.tanh %260 : vector<8x128xf32>
    %c96_i32_101 = arith.constant 96 : i32
    %262 = tpu.dynamic_rotate %257 by %c96_i32_101 dim 1 : vector<8x128xf32>, i32 -> vector<8x128xf32>
    %c64_i32_102 = arith.constant 64 : i32
    %263 = tpu.dynamic_rotate %261 by %c64_i32_102 dim 1 : vector<8x128xf32>, i32 -> vector<8x128xf32>
    %cst_103 = arith.constant 1.000000e+00 : f32
    %264 = vector.broadcast %cst_103 : f32 to vector<8x128xf32>
    %265 = arith.subf %264, %262 : vector<8x128xf32>
    %266 = arith.mulf %265, %263 : vector<8x128xf32>
    %267 = arith.mulf %262, %244 : vector<8x128xf32>
    %268 = arith.addf %266, %267 : vector<8x128xf32>
    %cst_104 = arith.constant 0.000000e+00 : f32
    %269 = vector.broadcast %cst_104 : f32 to vector<8x128xf32>
    %270 = arith.select %2, %268, %269 : vector<8x128xi1>, vector<8x128xf32>
    %271 = arith.index_cast %246 : i32 to index
    %c0_105 = arith.constant 0 : index
    %272 = vector.load %arg10[%271, %c0_105] : memref<64x128xf32, #tpu.memory_space<vmem>>, vector<8x128xf32>
    tpu.vector_store %arg10[%271, %c0_105], %270 {strides = array<i32>} : memref<64x128xf32, #tpu.memory_space<vmem>>, vector<8x128xf32>,
    %c1_i32_106 = arith.constant 1 : i32
    %c8_i32_107 = arith.constant 8 : i32
    %273 = arith.muli %c1_i32_106, %c8_i32_107 : i32
    %274 = tpu.assume_multiple %273, 8 : i32
    %275 = arith.index_cast %274 : i32 to index
    %c0_108 = arith.constant 0 : index
    %276 = vector.load %arg11[%275, %c0_108] : memref<64x128xf32, #tpu.memory_space<vmem>>, vector<8x128xf32>
    %277 = arith.truncf %270 : vector<8x128xf32> to vector<8x128xbf16>
    %cst_109 = arith.constant dense<0.000000e+00> : vector<8x128xf32>
    %278 = tpu.matmul %277, %240, %cst_109 {dimension_numbers = #tpu.dot_dimension_numbers<[1], [0], [0], [1], [0, 0, 1, 1], [], []>} : vector<8x128xbf16>, vector<128x128xbf16>, vector<8x128xf32> -> vector<8x128xf32>
    %279 = arith.addf %278, %243 : vector<8x128xf32>
    %280 = arith.addf %276, %279 : vector<8x128xf32>
    %281 = arith.negf %280 : vector<8x128xf32>
    %282 = math.exp %281 : vector<8x128xf32>
    %cst_110 = arith.constant 1.000000e+00 : f32
    %283 = vector.broadcast %cst_110 : f32 to vector<8x128xf32>
    %284 = arith.addf %283, %282 : vector<8x128xf32>
    %285 = arith.divf %283, %284 : vector<8x128xf32>
    %c64_i32_111 = arith.constant 64 : i32
    %286 = tpu.dynamic_rotate %285 by %c64_i32_111 dim 1 : vector<8x128xf32>, i32 -> vector<8x128xf32>
    %287 = arith.mulf %286, %279 : vector<8x128xf32>
    %288 = arith.addf %276, %287 : vector<8x128xf32>
    %289 = math.tanh %288 : vector<8x128xf32>
    %c96_i32_112 = arith.constant 96 : i32
    %290 = tpu.dynamic_rotate %285 by %c96_i32_112 dim 1 : vector<8x128xf32>, i32 -> vector<8x128xf32>
    %c64_i32_113 = arith.constant 64 : i32
    %291 = tpu.dynamic_rotate %289 by %c64_i32_113 dim 1 : vector<8x128xf32>, i32 -> vector<8x128xf32>
    %cst_114 = arith.constant 1.000000e+00 : f32
    %292 = vector.broadcast %cst_114 : f32 to vector<8x128xf32>
    %293 = arith.subf %292, %290 : vector<8x128xf32>
    %294 = arith.mulf %293, %291 : vector<8x128xf32>
    %295 = arith.mulf %290, %270 : vector<8x128xf32>
    %296 = arith.addf %294, %295 : vector<8x128xf32>
    %cst_115 = arith.constant 0.000000e+00 : f32
    %297 = vector.broadcast %cst_115 : f32 to vector<8x128xf32>
    %298 = arith.select %2, %296, %297 : vector<8x128xi1>, vector<8x128xf32>
    %299 = arith.index_cast %274 : i32 to index
    %c0_116 = arith.constant 0 : index
    %300 = vector.load %arg10[%299, %c0_116] : memref<64x128xf32, #tpu.memory_space<vmem>>, vector<8x128xf32>
    tpu.vector_store %arg10[%299, %c0_116], %298 {strides = array<i32>} : memref<64x128xf32, #tpu.memory_space<vmem>>, vector<8x128xf32>,
    %c2_i32_117 = arith.constant 2 : i32
    %c8_i32_118 = arith.constant 8 : i32
    %301 = arith.muli %c2_i32_117, %c8_i32_118 : i32
    %302 = tpu.assume_multiple %301, 8 : i32
    %303 = arith.index_cast %302 : i32 to index
    %c0_119 = arith.constant 0 : index
    %304 = vector.load %arg11[%303, %c0_119] : memref<64x128xf32, #tpu.memory_space<vmem>>, vector<8x128xf32>
    %305 = arith.truncf %298 : vector<8x128xf32> to vector<8x128xbf16>
    %cst_120 = arith.constant dense<0.000000e+00> : vector<8x128xf32>
    %306 = tpu.matmul %305, %240, %cst_120 {dimension_numbers = #tpu.dot_dimension_numbers<[1], [0], [0], [1], [0, 0, 1, 1], [], []>} : vector<8x128xbf16>, vector<128x128xbf16>, vector<8x128xf32> -> vector<8x128xf32>
    %307 = arith.addf %306, %243 : vector<8x128xf32>
    %308 = arith.addf %304, %307 : vector<8x128xf32>
    %309 = arith.negf %308 : vector<8x128xf32>
    %310 = math.exp %309 : vector<8x128xf32>
    %cst_121 = arith.constant 1.000000e+00 : f32
    %311 = vector.broadcast %cst_121 : f32 to vector<8x128xf32>
    %312 = arith.addf %311, %310 : vector<8x128xf32>
    %313 = arith.divf %311, %312 : vector<8x128xf32>
    %c64_i32_122 = arith.constant 64 : i32
    %314 = tpu.dynamic_rotate %313 by %c64_i32_122 dim 1 : vector<8x128xf32>, i32 -> vector<8x128xf32>
    %315 = arith.mulf %314, %307 : vector<8x128xf32>
    %316 = arith.addf %304, %315 : vector<8x128xf32>
    %317 = math.tanh %316 : vector<8x128xf32>
    %c96_i32_123 = arith.constant 96 : i32
    %318 = tpu.dynamic_rotate %313 by %c96_i32_123 dim 1 : vector<8x128xf32>, i32 -> vector<8x128xf32>
    %c64_i32_124 = arith.constant 64 : i32
    %319 = tpu.dynamic_rotate %317 by %c64_i32_124 dim 1 : vector<8x128xf32>, i32 -> vector<8x128xf32>
    %cst_125 = arith.constant 1.000000e+00 : f32
    %320 = vector.broadcast %cst_125 : f32 to vector<8x128xf32>
    %321 = arith.subf %320, %318 : vector<8x128xf32>
    %322 = arith.mulf %321, %319 : vector<8x128xf32>
    %323 = arith.mulf %318, %298 : vector<8x128xf32>
    %324 = arith.addf %322, %323 : vector<8x128xf32>
    %cst_126 = arith.constant 0.000000e+00 : f32
    %325 = vector.broadcast %cst_126 : f32 to vector<8x128xf32>
    %326 = arith.select %2, %324, %325 : vector<8x128xi1>, vector<8x128xf32>
    %327 = arith.index_cast %302 : i32 to index
    %c0_127 = arith.constant 0 : index
    %328 = vector.load %arg10[%327, %c0_127] : memref<64x128xf32, #tpu.memory_space<vmem>>, vector<8x128xf32>
    tpu.vector_store %arg10[%327, %c0_127], %326 {strides = array<i32>} : memref<64x128xf32, #tpu.memory_space<vmem>>, vector<8x128xf32>,
    %c3_i32_128 = arith.constant 3 : i32
    %c8_i32_129 = arith.constant 8 : i32
    %329 = arith.muli %c3_i32_128, %c8_i32_129 : i32
    %330 = tpu.assume_multiple %329, 8 : i32
    %331 = arith.index_cast %330 : i32 to index
    %c0_130 = arith.constant 0 : index
    %332 = vector.load %arg11[%331, %c0_130] : memref<64x128xf32, #tpu.memory_space<vmem>>, vector<8x128xf32>
    %333 = arith.truncf %326 : vector<8x128xf32> to vector<8x128xbf16>
    %cst_131 = arith.constant dense<0.000000e+00> : vector<8x128xf32>
    %334 = tpu.matmul %333, %240, %cst_131 {dimension_numbers = #tpu.dot_dimension_numbers<[1], [0], [0], [1], [0, 0, 1, 1], [], []>} : vector<8x128xbf16>, vector<128x128xbf16>, vector<8x128xf32> -> vector<8x128xf32>
    %335 = arith.addf %334, %243 : vector<8x128xf32>
    %336 = arith.addf %332, %335 : vector<8x128xf32>
    %337 = arith.negf %336 : vector<8x128xf32>
    %338 = math.exp %337 : vector<8x128xf32>
    %cst_132 = arith.constant 1.000000e+00 : f32
    %339 = vector.broadcast %cst_132 : f32 to vector<8x128xf32>
    %340 = arith.addf %339, %338 : vector<8x128xf32>
    %341 = arith.divf %339, %340 : vector<8x128xf32>
    %c64_i32_133 = arith.constant 64 : i32
    %342 = tpu.dynamic_rotate %341 by %c64_i32_133 dim 1 : vector<8x128xf32>, i32 -> vector<8x128xf32>
    %343 = arith.mulf %342, %335 : vector<8x128xf32>
    %344 = arith.addf %332, %343 : vector<8x128xf32>
    %345 = math.tanh %344 : vector<8x128xf32>
    %c96_i32_134 = arith.constant 96 : i32
    %346 = tpu.dynamic_rotate %341 by %c96_i32_134 dim 1 : vector<8x128xf32>, i32 -> vector<8x128xf32>
    %c64_i32_135 = arith.constant 64 : i32
    %347 = tpu.dynamic_rotate %345 by %c64_i32_135 dim 1 : vector<8x128xf32>, i32 -> vector<8x128xf32>
    %cst_136 = arith.constant 1.000000e+00 : f32
    %348 = vector.broadcast %cst_136 : f32 to vector<8x128xf32>
    %349 = arith.subf %348, %346 : vector<8x128xf32>
    %350 = arith.mulf %349, %347 : vector<8x128xf32>
    %351 = arith.mulf %346, %326 : vector<8x128xf32>
    %352 = arith.addf %350, %351 : vector<8x128xf32>
    %cst_137 = arith.constant 0.000000e+00 : f32
    %353 = vector.broadcast %cst_137 : f32 to vector<8x128xf32>
    %354 = arith.select %2, %352, %353 : vector<8x128xi1>, vector<8x128xf32>
    %355 = arith.index_cast %330 : i32 to index
    %c0_138 = arith.constant 0 : index
    %356 = vector.load %arg10[%355, %c0_138] : memref<64x128xf32, #tpu.memory_space<vmem>>, vector<8x128xf32>
    tpu.vector_store %arg10[%355, %c0_138], %354 {strides = array<i32>} : memref<64x128xf32, #tpu.memory_space<vmem>>, vector<8x128xf32>,
    %c4_i32_139 = arith.constant 4 : i32
    %c8_i32_140 = arith.constant 8 : i32
    %357 = arith.muli %c4_i32_139, %c8_i32_140 : i32
    %358 = tpu.assume_multiple %357, 8 : i32
    %359 = arith.index_cast %358 : i32 to index
    %c0_141 = arith.constant 0 : index
    %360 = vector.load %arg11[%359, %c0_141] : memref<64x128xf32, #tpu.memory_space<vmem>>, vector<8x128xf32>
    %361 = arith.truncf %354 : vector<8x128xf32> to vector<8x128xbf16>
    %cst_142 = arith.constant dense<0.000000e+00> : vector<8x128xf32>
    %362 = tpu.matmul %361, %240, %cst_142 {dimension_numbers = #tpu.dot_dimension_numbers<[1], [0], [0], [1], [0, 0, 1, 1], [], []>} : vector<8x128xbf16>, vector<128x128xbf16>, vector<8x128xf32> -> vector<8x128xf32>
    %363 = arith.addf %362, %243 : vector<8x128xf32>
    %364 = arith.addf %360, %363 : vector<8x128xf32>
    %365 = arith.negf %364 : vector<8x128xf32>
    %366 = math.exp %365 : vector<8x128xf32>
    %cst_143 = arith.constant 1.000000e+00 : f32
    %367 = vector.broadcast %cst_143 : f32 to vector<8x128xf32>
    %368 = arith.addf %367, %366 : vector<8x128xf32>
    %369 = arith.divf %367, %368 : vector<8x128xf32>
    %c64_i32_144 = arith.constant 64 : i32
    %370 = tpu.dynamic_rotate %369 by %c64_i32_144 dim 1 : vector<8x128xf32>, i32 -> vector<8x128xf32>
    %371 = arith.mulf %370, %363 : vector<8x128xf32>
    %372 = arith.addf %360, %371 : vector<8x128xf32>
    %373 = math.tanh %372 : vector<8x128xf32>
    %c96_i32_145 = arith.constant 96 : i32
    %374 = tpu.dynamic_rotate %369 by %c96_i32_145 dim 1 : vector<8x128xf32>, i32 -> vector<8x128xf32>
    %c64_i32_146 = arith.constant 64 : i32
    %375 = tpu.dynamic_rotate %373 by %c64_i32_146 dim 1 : vector<8x128xf32>, i32 -> vector<8x128xf32>
    %cst_147 = arith.constant 1.000000e+00 : f32
    %376 = vector.broadcast %cst_147 : f32 to vector<8x128xf32>
    %377 = arith.subf %376, %374 : vector<8x128xf32>
    %378 = arith.mulf %377, %375 : vector<8x128xf32>
    %379 = arith.mulf %374, %354 : vector<8x128xf32>
    %380 = arith.addf %378, %379 : vector<8x128xf32>
    %cst_148 = arith.constant 0.000000e+00 : f32
    %381 = vector.broadcast %cst_148 : f32 to vector<8x128xf32>
    %382 = arith.select %2, %380, %381 : vector<8x128xi1>, vector<8x128xf32>
    %383 = arith.index_cast %358 : i32 to index
    %c0_149 = arith.constant 0 : index
    %384 = vector.load %arg10[%383, %c0_149] : memref<64x128xf32, #tpu.memory_space<vmem>>, vector<8x128xf32>
    tpu.vector_store %arg10[%383, %c0_149], %382 {strides = array<i32>} : memref<64x128xf32, #tpu.memory_space<vmem>>, vector<8x128xf32>,
    %c5_i32_150 = arith.constant 5 : i32
    %c8_i32_151 = arith.constant 8 : i32
    %385 = arith.muli %c5_i32_150, %c8_i32_151 : i32
    %386 = tpu.assume_multiple %385, 8 : i32
    %387 = arith.index_cast %386 : i32 to index
    %c0_152 = arith.constant 0 : index
    %388 = vector.load %arg11[%387, %c0_152] : memref<64x128xf32, #tpu.memory_space<vmem>>, vector<8x128xf32>
    %389 = arith.truncf %382 : vector<8x128xf32> to vector<8x128xbf16>
    %cst_153 = arith.constant dense<0.000000e+00> : vector<8x128xf32>
    %390 = tpu.matmul %389, %240, %cst_153 {dimension_numbers = #tpu.dot_dimension_numbers<[1], [0], [0], [1], [0, 0, 1, 1], [], []>} : vector<8x128xbf16>, vector<128x128xbf16>, vector<8x128xf32> -> vector<8x128xf32>
    %391 = arith.addf %390, %243 : vector<8x128xf32>
    %392 = arith.addf %388, %391 : vector<8x128xf32>
    %393 = arith.negf %392 : vector<8x128xf32>
    %394 = math.exp %393 : vector<8x128xf32>
    %cst_154 = arith.constant 1.000000e+00 : f32
    %395 = vector.broadcast %cst_154 : f32 to vector<8x128xf32>
    %396 = arith.addf %395, %394 : vector<8x128xf32>
    %397 = arith.divf %395, %396 : vector<8x128xf32>
    %c64_i32_155 = arith.constant 64 : i32
    %398 = tpu.dynamic_rotate %397 by %c64_i32_155 dim 1 : vector<8x128xf32>, i32 -> vector<8x128xf32>
    %399 = arith.mulf %398, %391 : vector<8x128xf32>
    %400 = arith.addf %388, %399 : vector<8x128xf32>
    %401 = math.tanh %400 : vector<8x128xf32>
    %c96_i32_156 = arith.constant 96 : i32
    %402 = tpu.dynamic_rotate %397 by %c96_i32_156 dim 1 : vector<8x128xf32>, i32 -> vector<8x128xf32>
    %c64_i32_157 = arith.constant 64 : i32
    %403 = tpu.dynamic_rotate %401 by %c64_i32_157 dim 1 : vector<8x128xf32>, i32 -> vector<8x128xf32>
    %cst_158 = arith.constant 1.000000e+00 : f32
    %404 = vector.broadcast %cst_158 : f32 to vector<8x128xf32>
    %405 = arith.subf %404, %402 : vector<8x128xf32>
    %406 = arith.mulf %405, %403 : vector<8x128xf32>
    %407 = arith.mulf %402, %382 : vector<8x128xf32>
    %408 = arith.addf %406, %407 : vector<8x128xf32>
    %cst_159 = arith.constant 0.000000e+00 : f32
    %409 = vector.broadcast %cst_159 : f32 to vector<8x128xf32>
    %410 = arith.select %2, %408, %409 : vector<8x128xi1>, vector<8x128xf32>
    %411 = arith.index_cast %386 : i32 to index
    %c0_160 = arith.constant 0 : index
    %412 = vector.load %arg10[%411, %c0_160] : memref<64x128xf32, #tpu.memory_space<vmem>>, vector<8x128xf32>
    tpu.vector_store %arg10[%411, %c0_160], %410 {strides = array<i32>} : memref<64x128xf32, #tpu.memory_space<vmem>>, vector<8x128xf32>,
    %c6_i32_161 = arith.constant 6 : i32
    %c8_i32_162 = arith.constant 8 : i32
    %413 = arith.muli %c6_i32_161, %c8_i32_162 : i32
    %414 = tpu.assume_multiple %413, 8 : i32
    %415 = arith.index_cast %414 : i32 to index
    %c0_163 = arith.constant 0 : index
    %416 = vector.load %arg11[%415, %c0_163] : memref<64x128xf32, #tpu.memory_space<vmem>>, vector<8x128xf32>
    %417 = arith.truncf %410 : vector<8x128xf32> to vector<8x128xbf16>
    %cst_164 = arith.constant dense<0.000000e+00> : vector<8x128xf32>
    %418 = tpu.matmul %417, %240, %cst_164 {dimension_numbers = #tpu.dot_dimension_numbers<[1], [0], [0], [1], [0, 0, 1, 1], [], []>} : vector<8x128xbf16>, vector<128x128xbf16>, vector<8x128xf32> -> vector<8x128xf32>
    %419 = arith.addf %418, %243 : vector<8x128xf32>
    %420 = arith.addf %416, %419 : vector<8x128xf32>
    %421 = arith.negf %420 : vector<8x128xf32>
    %422 = math.exp %421 : vector<8x128xf32>
    %cst_165 = arith.constant 1.000000e+00 : f32
    %423 = vector.broadcast %cst_165 : f32 to vector<8x128xf32>
    %424 = arith.addf %423, %422 : vector<8x128xf32>
    %425 = arith.divf %423, %424 : vector<8x128xf32>
    %c64_i32_166 = arith.constant 64 : i32
    %426 = tpu.dynamic_rotate %425 by %c64_i32_166 dim 1 : vector<8x128xf32>, i32 -> vector<8x128xf32>
    %427 = arith.mulf %426, %419 : vector<8x128xf32>
    %428 = arith.addf %416, %427 : vector<8x128xf32>
    %429 = math.tanh %428 : vector<8x128xf32>
    %c96_i32_167 = arith.constant 96 : i32
    %430 = tpu.dynamic_rotate %425 by %c96_i32_167 dim 1 : vector<8x128xf32>, i32 -> vector<8x128xf32>
    %c64_i32_168 = arith.constant 64 : i32
    %431 = tpu.dynamic_rotate %429 by %c64_i32_168 dim 1 : vector<8x128xf32>, i32 -> vector<8x128xf32>
    %cst_169 = arith.constant 1.000000e+00 : f32
    %432 = vector.broadcast %cst_169 : f32 to vector<8x128xf32>
    %433 = arith.subf %432, %430 : vector<8x128xf32>
    %434 = arith.mulf %433, %431 : vector<8x128xf32>
    %435 = arith.mulf %430, %410 : vector<8x128xf32>
    %436 = arith.addf %434, %435 : vector<8x128xf32>
    %cst_170 = arith.constant 0.000000e+00 : f32
    %437 = vector.broadcast %cst_170 : f32 to vector<8x128xf32>
    %438 = arith.select %2, %436, %437 : vector<8x128xi1>, vector<8x128xf32>
    %439 = arith.index_cast %414 : i32 to index
    %c0_171 = arith.constant 0 : index
    %440 = vector.load %arg10[%439, %c0_171] : memref<64x128xf32, #tpu.memory_space<vmem>>, vector<8x128xf32>
    tpu.vector_store %arg10[%439, %c0_171], %438 {strides = array<i32>} : memref<64x128xf32, #tpu.memory_space<vmem>>, vector<8x128xf32>,
    %c7_i32_172 = arith.constant 7 : i32
    %c8_i32_173 = arith.constant 8 : i32
    %441 = arith.muli %c7_i32_172, %c8_i32_173 : i32
    %442 = tpu.assume_multiple %441, 8 : i32
    %443 = arith.index_cast %442 : i32 to index
    %c0_174 = arith.constant 0 : index
    %444 = vector.load %arg11[%443, %c0_174] : memref<64x128xf32, #tpu.memory_space<vmem>>, vector<8x128xf32>
    %445 = arith.truncf %438 : vector<8x128xf32> to vector<8x128xbf16>
    %cst_175 = arith.constant dense<0.000000e+00> : vector<8x128xf32>
    %446 = tpu.matmul %445, %240, %cst_175 {dimension_numbers = #tpu.dot_dimension_numbers<[1], [0], [0], [1], [0, 0, 1, 1], [], []>} : vector<8x128xbf16>, vector<128x128xbf16>, vector<8x128xf32> -> vector<8x128xf32>
    %447 = arith.addf %446, %243 : vector<8x128xf32>
    %448 = arith.addf %444, %447 : vector<8x128xf32>
    %449 = arith.negf %448 : vector<8x128xf32>
    %450 = math.exp %449 : vector<8x128xf32>
    %cst_176 = arith.constant 1.000000e+00 : f32
    %451 = vector.broadcast %cst_176 : f32 to vector<8x128xf32>
    %452 = arith.addf %451, %450 : vector<8x128xf32>
    %453 = arith.divf %451, %452 : vector<8x128xf32>
    %c64_i32_177 = arith.constant 64 : i32
    %454 = tpu.dynamic_rotate %453 by %c64_i32_177 dim 1 : vector<8x128xf32>, i32 -> vector<8x128xf32>
    %455 = arith.mulf %454, %447 : vector<8x128xf32>
    %456 = arith.addf %444, %455 : vector<8x128xf32>
    %457 = math.tanh %456 : vector<8x128xf32>
    %c96_i32_178 = arith.constant 96 : i32
    %458 = tpu.dynamic_rotate %453 by %c96_i32_178 dim 1 : vector<8x128xf32>, i32 -> vector<8x128xf32>
    %c64_i32_179 = arith.constant 64 : i32
    %459 = tpu.dynamic_rotate %457 by %c64_i32_179 dim 1 : vector<8x128xf32>, i32 -> vector<8x128xf32>
    %cst_180 = arith.constant 1.000000e+00 : f32
    %460 = vector.broadcast %cst_180 : f32 to vector<8x128xf32>
    %461 = arith.subf %460, %458 : vector<8x128xf32>
    %462 = arith.mulf %461, %459 : vector<8x128xf32>
    %463 = arith.mulf %458, %438 : vector<8x128xf32>
    %464 = arith.addf %462, %463 : vector<8x128xf32>
    %cst_181 = arith.constant 0.000000e+00 : f32
    %465 = vector.broadcast %cst_181 : f32 to vector<8x128xf32>
    %466 = arith.select %2, %464, %465 : vector<8x128xi1>, vector<8x128xf32>
    %467 = arith.index_cast %442 : i32 to index
    %c0_182 = arith.constant 0 : index
    %468 = vector.load %arg10[%467, %c0_182] : memref<64x128xf32, #tpu.memory_space<vmem>>, vector<8x128xf32>
    tpu.vector_store %arg10[%467, %c0_182], %466 {strides = array<i32>} : memref<64x128xf32, #tpu.memory_space<vmem>>, vector<8x128xf32>,
    %c8_i32_183 = arith.constant 8 : i32
    %c0_184 = arith.constant 0 : index
    %c0_185 = arith.constant 0 : index
    %469 = vector.load %arg10[%c0_184, %c0_185] : memref<64x128xf32, #tpu.memory_space<vmem>>, vector<64x128xf32>
    %470 = arith.truncf %469 : vector<64x128xf32> to vector<64x128xbf16>
    %c0_186 = arith.constant 0 : index
    %c0_187 = arith.constant 0 : index
    %471 = vector.load %arg7[%c0_186, %c0_187] : memref<128x128xbf16, #tpu.memory_space<vmem>>, vector<128x128xbf16>
    %cst_188 = arith.constant dense<0.000000e+00> : vector<64x128xf32>
    %472 = tpu.matmul %470, %471, %cst_188 {dimension_numbers = #tpu.dot_dimension_numbers<[1], [0], [0], [1], [0, 0, 1, 1], [], []>} : vector<64x128xbf16>, vector<128x128xbf16>, vector<64x128xf32> -> vector<64x128xf32>
    %c0_189 = arith.constant 0 : index
    %c0_190 = arith.constant 0 : index
    %473 = vector.load %arg8[%c0_189, %c0_190] : memref<1x128xf32, #tpu.memory_space<vmem>>, vector<1x128xf32>
    %474 = vector.broadcast %473 : vector<1x128xf32> to vector<64x128xf32>
    %475 = arith.addf %472, %474 : vector<64x128xf32>
    %c0_191 = arith.constant 0 : index
    %c0_192 = arith.constant 0 : index
    %476 = vector.load %arg9[%c0_191, %c0_192] : memref<64x128xf32, #tpu.memory_space<vmem>>, vector<64x128xf32>
    tpu.vector_store %arg9[%c0_191, %c0_192], %475 {strides = array<i32>} : memref<64x128xf32, #tpu.memory_space<vmem>>, vector<64x128xf32>,
    return
  }
}

</mosaic_0001>

<llo_original>
// kernel: tpu_custom_call.1
$region0: #{tpu_custom_call.1}
  #allocation0 [shape = 'u32[]', space=smem, size = 0x4, offset = 0x4, fixed_abs, tag = 'smem constant byte address 0x4 - core index']
  #allocation1 [shape = 'u32[144,128]{1,0:T(1,128)}', space=vmem, size = 0x12000, scoped, tag = 'internal scratch']
  #allocation2 [shape = 'f32[64,128]{1,0:T(8,128)}', space=vmem, size = 0x8000, scoped, tag = 'scratch operand']
  #allocation3 [shape = 'f32[64,128]{1,0:T(8,128)}', space=vmem, size = 0x8000, scoped, tag = 'scratch operand']
  %s0 = inlined_call_operand.hbm [shape: f32[64,128], index: 0, kind: input, shape index: {}]
  %s1 = inlined_call_operand.hbm [shape: bf16[128,128], index: 1, kind: input, shape index: {}]
  %s2 = inlined_call_operand.vmem [shape: f32[1,128], index: 2, kind: input, shape index: {}]
  %s3 = inlined_call_operand.hbm [shape: bf16[128,128], index: 3, kind: input, shape index: {}]
  %s4 = inlined_call_operand.vmem [shape: f32[1,128], index: 4, kind: input, shape index: {}]
  %s5 = inlined_call_operand.hbm [shape: bf16[128,128], index: 5, kind: input, shape index: {}]
  %s6 = inlined_call_operand.vmem [shape: f32[1,128], index: 6, kind: input, shape index: {}]
  %s7 = inlined_call_operand.hbm [shape: bf16[128,128], index: 7, kind: input, shape index: {}]
  %s8 = inlined_call_operand.vmem [shape: f32[1,128], index: 8, kind: input, shape index: {}]
  %s9 = inlined_call_operand.hbm [shape: f32[64,128], index: 9, kind: output, shape index: {}]
  %s10 = sld [smem:[#allocation0]]
  $region66: #{tpu_custom_call.1} parent=0
    _
  %s12 = ssub.s32 1, %s10
  %s13 = scalar_select 0, %s12, %s10
  $region1: #{tpu_custom_call.1} parent=0
    #allocation4 [shape = 'u8[32768]{0}', space=vmem, size = 0x8000, scoped, tag = 'input window, operand 0, single buffered']
    #allocation5 [shape = 's32[1]{0}', space=sflag, size = 0x4, scoped, tag = 'scoped memory for tpu_custom_call.1']
    #allocation6 [shape = 's32[1]{0}', space=sflag, size = 0x4, scoped, tag = 'scoped memory for tpu_custom_call.1']
    #allocation7 [shape = 'u8[32768]{0}', space=vmem, size = 0x8000, scoped, tag = 'input window, operand 1, single buffered']
    #allocation8 [shape = 's32[1]{0}', space=sflag, size = 0x4, scoped, tag = 'scoped memory for tpu_custom_call.1']
    #allocation9 [shape = 'u8[32768]{0}', space=vmem, size = 0x8000, scoped, tag = 'input window, operand 3, single buffered']
    #allocation10 [shape = 'u8[32768]{0}', space=vmem, size = 0x8000, scoped, tag = 'input window, operand 5, single buffered']
    #allocation11 [shape = 's32[1]{0}', space=sflag, size = 0x4, scoped, tag = 'scoped memory for tpu_custom_call.1']
    #allocation12 [shape = 'u8[32768]{0}', space=vmem, size = 0x8000, scoped, tag = 'input window, operand 7, single buffered']
    #allocation13 [shape = 'u8[32768]{0}', space=vmem, size = 0x8000, scoped, tag = 'output window, operand 0, single buffered']
    %14 = vsyncpa [#allocation5], 0
    %15 = vsyncpa [#allocation8], 0
    %16 = vsyncpa [#allocation11], 0
    %17 = vsyncpa [#allocation6], 0
    // Predicated region
    $region2: #{tpu_custom_call.1} parent=1 // pred_check
      _
    $region3: #{tpu_custom_call.1} parent=1 // pred_check_branch
      %19 = sbr.rel (0) target = $region5
    $region4: #{tpu_custom_call.1} parent=1 // pred_region
      %s21 = ssub.s32 1024, 1024
      %22 = vsyncadd [#allocation5], %s21
      %s23 = sshll.u32 [#allocation4], 4
      %s24 = int_to_ptr.vmem [resolvable:$true] %s23
      %29 = dma.hbm_to_vmem [thread:$0]  %s0, 1024, %s24, [#allocation5], 128, 128, 8
    $region5: #{tpu_custom_call.1} parent=1 // pred_fallthru
      _
    // Predicated region
    $region6: #{tpu_custom_call.1} parent=1 // pred_check
      _
    $region7: #{tpu_custom_call.1} parent=1 // pred_check_branch
      %31 = sbr.rel (0) target = $region9
    $region8: #{tpu_custom_call.1} parent=1 // pred_region
      %s33 = ssub.s32 1024, 1024
      %34 = vsyncadd [#allocation8], %s33
      %s35 = sshll.u32 [#allocation7], 4
      %s36 = int_to_ptr.vmem [resolvable:$true] %s35
      %41 = dma.hbm_to_vmem [thread:$0]  %s1, 1024, %s36, [#allocation8], 64, 64, 4
    $region9: #{tpu_custom_call.1} parent=1 // pred_fallthru
      _
    // Predicated region
    $region10: #{tpu_custom_call.1} parent=1 // pred_check
      _
    $region11: #{tpu_custom_call.1} parent=1 // pred_check_branch
      %43 = sbr.rel (0) target = $region13
    $region12: #{tpu_custom_call.1} parent=1 // pred_region
      _
    $region13: #{tpu_custom_call.1} parent=1 // pred_fallthru
      _
    // Predicated region
    $region14: #{tpu_custom_call.1} parent=1 // pred_check
      _
    $region15: #{tpu_custom_call.1} parent=1 // pred_check_branch
      %45 = sbr.rel (0) target = $region17
    $region16: #{tpu_custom_call.1} parent=1 // pred_region
      %s47 = ssub.s32 1024, 1024
      %48 = vsyncadd [#allocation8], %s47
      %s49 = sshll.u32 [#allocation9], 4
      %s50 = int_to_ptr.vmem [resolvable:$true] %s49
      %55 = dma.hbm_to_vmem [thread:$0]  %s3, 1024, %s50, [#allocation8], 64, 64, 4
    $region17: #{tpu_custom_call.1} parent=1 // pred_fallthru
      _
    // Predicated region
    $region18: #{tpu_custom_call.1} parent=1 // pred_check
      _
    $region19: #{tpu_custom_call.1} parent=1 // pred_check_branch
      %57 = sbr.rel (0) target = $region21
    $region20: #{tpu_custom_call.1} parent=1 // pred_region
      _
    $region21: #{tpu_custom_call.1} parent=1 // pred_fallthru
      _
    // Predicated region
    $region22: #{tpu_custom_call.1} parent=1 // pred_check
      _
    $region23: #{tpu_custom_call.1} parent=1 // pred_check_branch
      %59 = sbr.rel (0) target = $region25
    $region24: #{tpu_custom_call.1} parent=1 // pred_region
      %s61 = ssub.s32 1024, 1024
      %62 = vsyncadd [#allocation11], %s61
      %s63 = sshll.u32 [#allocation10], 4
      %s64 = int_to_ptr.vmem [resolvable:$true] %s63
      %69 = dma.hbm_to_vmem [thread:$0]  %s5, 1024, %s64, [#allocation11], 64, 64, 4
    $region25: #{tpu_custom_call.1} parent=1 // pred_fallthru
      _
    // Predicated region
    $region26: #{tpu_custom_call.1} parent=1 // pred_check
      _
    $region27: #{tpu_custom_call.1} parent=1 // pred_check_branch
      %71 = sbr.rel (0) target = $region29
    $region28: #{tpu_custom_call.1} parent=1 // pred_region
      _
    $region29: #{tpu_custom_call.1} parent=1 // pred_fallthru
      _
    // Predicated region
    $region30: #{tpu_custom_call.1} parent=1 // pred_check
      _
    $region31: #{tpu_custom_call.1} parent=1 // pred_check_branch
      %73 = sbr.rel (0) target = $region33
    $region32: #{tpu_custom_call.1} parent=1 // pred_region
      %s75 = ssub.s32 1024, 1024
      %76 = vsyncadd [#allocation11], %s75
      %s77 = sshll.u32 [#allocation12], 4
      %s78 = int_to_ptr.vmem [resolvable:$true] %s77
      %83 = dma.hbm_to_vmem [thread:$0]  %s7, 1024, %s78, [#allocation11], 64, 64, 4
    $region33: #{tpu_custom_call.1} parent=1 // pred_fallthru
      _
    // Predicated region
    $region34: #{tpu_custom_call.1} parent=1 // pred_check
      _
    $region35: #{tpu_custom_call.1} parent=1 // pred_check_branch
      %85 = sbr.rel (0) target = $region37
    $region36: #{tpu_custom_call.1} parent=1 // pred_region
      _
    $region37: #{tpu_custom_call.1} parent=1 // pred_fallthru
      _
    // Predicated region
    $region38: #{tpu_custom_call.1} parent=1 // pred_check
      _
    $region39: #{tpu_custom_call.1} parent=1 // pred_check_branch
      %87 = sbr.rel (0) target = $region41
    $region40: #{tpu_custom_call.1} parent=1 // pred_region
      %88 = dma.done [#allocation5], 1024
    $region41: #{tpu_custom_call.1} parent=1 // pred_fallthru
      _
    // Predicated region
    $region42: #{tpu_custom_call.1} parent=1 // pred_check
      _
    $region43: #{tpu_custom_call.1} parent=1 // pred_check_branch
      %90 = sbr.rel (0) target = $region45
    $region44: #{tpu_custom_call.1} parent=1 // pred_region
      %91 = dma.done [#allocation8], 1024
    $region45: #{tpu_custom_call.1} parent=1 // pred_fallthru
      _
    // Predicated region
    $region46: #{tpu_custom_call.1} parent=1 // pred_check
      _
    $region47: #{tpu_custom_call.1} parent=1 // pred_check_branch
      %93 = sbr.rel (0) target = $region49
    $region48: #{tpu_custom_call.1} parent=1 // pred_region
      %94 = dma.done [#allocation8], 1024
    $region49: #{tpu_custom_call.1} parent=1 // pred_fallthru
      _
    // Predicated region
    $region50: #{tpu_custom_call.1} parent=1 // pred_check
      _
    $region51: #{tpu_custom_call.1} parent=1 // pred_check_branch
      %96 = sbr.rel (0) target = $region53
    $region52: #{tpu_custom_call.1} parent=1 // pred_region
      %97 = dma.done [#allocation11], 1024
    $region53: #{tpu_custom_call.1} parent=1 // pred_fallthru
      _
    // Predicated region
    $region54: #{tpu_custom_call.1} parent=1 // pred_check
      _
    $region55: #{tpu_custom_call.1} parent=1 // pred_check_branch
      %99 = sbr.rel (0) target = $region57
    $region56: #{tpu_custom_call.1} parent=1 // pred_region
      %100 = dma.done [#allocation11], 1024
    $region57: #{tpu_custom_call.1} parent=1 // pred_fallthru
      _
    %v102 = vlaneseq
    %v103 = vand.u32 %v102, 127
    %vm104 = vcmp.lt.s32.totalorder %v103, 32
    %v105 = vld [vmem:[#allocation7] sm:$0xf]
    %v106 = vld [vmem:[#allocation7 + $0x4] sm:$0xf]
    %v107 = vld [vmem:[#allocation7 + $0x8] sm:$0xf]
    %v108 = vld [vmem:[#allocation7 + $0xc] sm:$0xf]
    %v109 = vld [vmem:[#allocation7 + $0x10] sm:$0xf]
    %v110 = vld [vmem:[#allocation7 + $0x14] sm:$0xf]
    %v111 = vld [vmem:[#allocation7 + $0x18] sm:$0xf]
    %v112 = vld [vmem:[#allocation7 + $0x1c] sm:$0xf]
    %v113 = vld [vmem:[#allocation7 + $0x20] sm:$0xf]
    %v114 = vld [vmem:[#allocation7 + $0x24] sm:$0xf]
    %v115 = vld [vmem:[#allocation7 + $0x28] sm:$0xf]
    %v116 = vld [vmem:[#allocation7 + $0x2c] sm:$0xf]
    %v117 = vld [vmem:[#allocation7 + $0x30] sm:$0xf]
    %v118 = vld [vmem:[#allocation7 + $0x34] sm:$0xf]
    %v119 = vld [vmem:[#allocation7 + $0x38] sm:$0xf]
    %v120 = vld [vmem:[#allocation7 + $0x3c] sm:$0xf]
    %v121 = vld [vmem:[%s2] sm:$0x1]
    %v123 = vlaneseq
    %v124 = vshrl.u32 %v123, 7
    %v125 = vsub.s32 0, %v124
    %v126 = vrot.slane %v121, %v125
    %v128 = vld [vmem:[#allocation4] sm:$0xff]
    %v145 = vunpack.c.l.b16 %v105
    %v146 = vunpack.c.l.b16 %v106
    %v147 = vunpack.c.l.b16 %v107
    %v148 = vunpack.c.l.b16 %v108
    %v149 = vunpack.c.l.b16 %v109
    %v150 = vunpack.c.l.b16 %v110
    %v151 = vunpack.c.l.b16 %v111
    %v152 = vunpack.c.l.b16 %v112
    %v153 = vunpack.c.l.b16 %v113
    %v154 = vunpack.c.l.b16 %v114
    %v155 = vunpack.c.l.b16 %v115
    %v156 = vunpack.c.l.b16 %v116
    %v157 = vunpack.c.l.b16 %v117
    %v158 = vunpack.c.l.b16 %v118
    %v159 = vunpack.c.l.b16 %v119
    %v160 = vunpack.c.l.b16 %v120
    %v161 = vpack.c.b16 %v146, %v145
    %v162 = vpack.c.b16 %v148, %v147
    %v163 = vpack.c.b16 %v150, %v149
    %v164 = vpack.c.b16 %v152, %v151
    %v165 = vpack.c.b16 %v154, %v153
    %v166 = vpack.c.b16 %v156, %v155
    %v167 = vpack.c.b16 %v158, %v157
    %v168 = vpack.c.b16 %v160, %v159
    %177 = vmatprep.subr.bf16.mxu0 0
    %178 = vmatpush1.bf16.msra.mxu0 %v161
    %179 = vmatprep.subr.bf16.mxu0 0
    %180 = vmatpush1.bf16.msra.mxu0 %v162
    %181 = vmatprep.subr.bf16.mxu0 0
    %182 = vmatpush1.bf16.msra.mxu0 %v163
    %183 = vmatprep.subr.bf16.mxu0 0
    %184 = vmatpush1.bf16.msra.mxu0 %v164
    %185 = vmatprep.subr.bf16.mxu0 0
    %186 = vmatpush1.bf16.msra.mxu0 %v165
    %187 = vmatprep.subr.bf16.mxu0 0
    %188 = vmatpush1.bf16.msra.mxu0 %v166
    %189 = vmatprep.subr.bf16.mxu0 0
    %190 = vmatpush1.bf16.msra.mxu0 %v167
    %191 = vmatprep.subr.bf16.mxu0 0
    %192 = vmatpush1.bf16.msra.mxu0 %v168
    %193 = vmatprep.subr.bf16.mxu0 0
    %194 = vmatpush1.bf16.msra.mxu0 0
    %195 = vmatprep.subr.bf16.mxu0 0
    %196 = vmatpush1.bf16.msra.mxu0 0
    %197 = vmatprep.subr.bf16.mxu0 0
    %198 = vmatpush1.bf16.msra.mxu0 0
    %199 = vmatprep.subr.bf16.mxu0 0
    %200 = vmatpush1.bf16.msra.mxu0 0
    %201 = vmatprep.subr.bf16.mxu0 0
    %202 = vmatpush1.bf16.msra.mxu0 0
    %203 = vmatprep.subr.bf16.mxu0 0
    %204 = vmatpush1.bf16.msra.mxu0 0
    %205 = vmatprep.subr.bf16.mxu0 0
    %206 = vmatpush1.bf16.msra.mxu0 0
    %207 = vmatprep.subr.bf16.mxu0 0
    %208 = vmatpush1.bf16.msra.mxu0 0
    %209 = vmatprep.mubr.bf16.mxu0 0
    %210 = vmatmul.mubr.bf16.gmra.mrb[0].mxu0 0
    %v211 = vpop.f32.mrb[0].mxu0
    %v212 = vadd.f32 %v126, %v211
    %v213 = vpop.f32.mrb[0].mxu0
    %v214 = vpop.f32.mrb[0].mxu0
    %v215 = vpop.f32.mrb[0].mxu0
    %216 = vdwg.mxu0
    %v217 = vadd.f32 %v128, %v212
    %v218 = vxor.u32 %v217, 2147483648
    %v219 = vmul.f32 %v218, 1.442695
    %v220 = vpow.pop %v219
    %v221 = vadd.f32 %v220, 1.0
    %v222 = vrcp.pop %v221
    %v223 = vmul.f32 1.0, %v222
    %224 = vrot.lane.b32.xlu0 %v223, 64
    %v225 = vpop.permute.xlu0 %224
    %v226 = vmul.f32 %v225, %v212
    %v227 = vadd.f32 %v128, %v226
    %v228 = vtanh.pop %v227
    %229 = vrot.lane.b32.xlu0 %v223, 96
    %v230 = vpop.permute.xlu0 %229
    %231 = vrot.lane.b32.xlu0 %v228, 64
    %v232 = vpop.permute.xlu0 %231
    %v233 = vsub.f32 1.0, %v230
    %v234 = vmul.f32 %v233, %v232
    %v235 = vmul.f32 %v230, 0.0
    %v236 = vadd.f32 %v234, %v235
    %v237 = vsel %vm104, %v236, 0.0
    %238 = vst [vmem:[#allocation2] sm:$0xff] %v237
    %s239 = scalar_lea.vmem [#allocation4], 8
    %v240 = vld [vmem:[%s239] sm:$0xff]
    %v241 = vpack.c.bf16 %v237, %v237
    %242 = vmatprep.subr.bf16.mxu0 0
    %243 = vmatpush1.bf16.msra.mxu0 %v161
    %244 = vmatprep.subr.bf16.mxu0 0
    %245 = vmatpush1.bf16.msra.mxu0 %v162
    %246 = vmatprep.subr.bf16.mxu0 0
    %247 = vmatpush1.bf16.msra.mxu0 %v163
    %248 = vmatprep.subr.bf16.mxu0 0
    %249 = vmatpush1.bf16.msra.mxu0 %v164
    %250 = vmatprep.subr.bf16.mxu0 0
    %251 = vmatpush1.bf16.msra.mxu0 %v165
    %252 = vmatprep.subr.bf16.mxu0 0
    %253 = vmatpush1.bf16.msra.mxu0 %v166
    %254 = vmatprep.subr.bf16.mxu0 0
    %255 = vmatpush1.bf16.msra.mxu0 %v167
    %256 = vmatprep.subr.bf16.mxu0 0
    %257 = vmatpush1.bf16.msra.mxu0 %v168
    %258 = vmatprep.subr.bf16.mxu0 0
    %259 = vmatpush1.bf16.msra.mxu0 0
    %260 = vmatprep.subr.bf16.mxu0 0
    %261 = vmatpush1.bf16.msra.mxu0 0
    %262 = vmatprep.subr.bf16.mxu0 0
    %263 = vmatpush1.bf16.msra.mxu0 0
    %264 = vmatprep.subr.bf16.mxu0 0
    %265 = vmatpush1.bf16.msra.mxu0 0
    %266 = vmatprep.subr.bf16.mxu0 0
    %267 = vmatpush1.bf16.msra.mxu0 0
    %268 = vmatprep.subr.bf16.mxu0 0
    %269 = vmatpush1.bf16.msra.mxu0 0
    %270 = vmatprep.subr.bf16.mxu0 0
    %271 = vmatpush1.bf16.msra.mxu0 0
    %272 = vmatprep.subr.bf16.mxu0 0
    %273 = vmatpush1.bf16.msra.mxu0 0
    %274 = vmatprep.mubr.bf16.mxu0 0
    %275 = vmatmul.mubr.bf16.gmra.mrb[0].mxu0 %v241
    %v276 = vpop.f32.mrb[0].mxu0
    %v277 = vadd.f32 %v126, %v276
    %v278 = vpop.f32.mrb[0].mxu0
    %v279 = vpop.f32.mrb[0].mxu0
    %v280 = vpop.f32.mrb[0].mxu0
    %281 = vdwg.mxu0
    %v282 = vadd.f32 %v240, %v277
    %v283 = vxor.u32 %v282, 2147483648
    %v284 = vmul.f32 %v283, 1.442695
    %v285 = vpow.pop %v284
    %v286 = vadd.f32 %v285, 1.0
    %v287 = vrcp.pop %v286
    %v288 = vmul.f32 1.0, %v287
    %289 = vrot.lane.b32.xlu0 %v288, 64
    %v290 = vpop.permute.xlu0 %289
    %v291 = vmul.f32 %v290, %v277
    %v292 = vadd.f32 %v240, %v291
    %v293 = vtanh.pop %v292
    %294 = vrot.lane.b32.xlu0 %v288, 96
    %v295 = vpop.permute.xlu0 %294
    %296 = vrot.lane.b32.xlu0 %v293, 64
    %v297 = vpop.permute.xlu0 %296
    %v298 = vsub.f32 1.0, %v295
    %v299 = vmul.f32 %v298, %v297
    %v300 = vmul.f32 %v295, %v237
    %v301 = vadd.f32 %v299, %v300
    %v302 = vsel %vm104, %v301, 0.0
    %s303 = scalar_lea.vmem [#allocation2], 8
    %304 = vst [vmem:[%s303] sm:$0xff] %v302
    %s305 = scalar_lea.vmem [#allocation4], 16
    %v306 = vld [vmem:[%s305] sm:$0xff]
    %v307 = vpack.c.bf16 %v302, %v302
    %308 = vmatprep.subr.bf16.mxu0 0
    %309 = vmatpush1.bf16.msra.mxu0 %v161
    %310 = vmatprep.subr.bf16.mxu0 0
    %311 = vmatpush1.bf16.msra.mxu0 %v162
    %312 = vmatprep.subr.bf16.mxu0 0
    %313 = vmatpush1.bf16.msra.mxu0 %v163
    %314 = vmatprep.subr.bf16.mxu0 0
    %315 = vmatpush1.bf16.msra.mxu0 %v164
    %316 = vmatprep.subr.bf16.mxu0 0
    %317 = vmatpush1.bf16.msra.mxu0 %v165
    %318 = vmatprep.subr.bf16.mxu0 0
    %319 = vmatpush1.bf16.msra.mxu0 %v166
    %320 = vmatprep.subr.bf16.mxu0 0
    %321 = vmatpush1.bf16.msra.mxu0 %v167
    %322 = vmatprep.subr.bf16.mxu0 0
    %323 = vmatpush1.bf16.msra.mxu0 %v168
    %324 = vmatprep.subr.bf16.mxu0 0
    %325 = vmatpush1.bf16.msra.mxu0 0
    %326 = vmatprep.subr.bf16.mxu0 0
    %327 = vmatpush1.bf16.msra.mxu0 0
    %328 = vmatprep.subr.bf16.mxu0 0
    %329 = vmatpush1.bf16.msra.mxu0 0
    %330 = vmatprep.subr.bf16.mxu0 0
    %331 = vmatpush1.bf16.msra.mxu0 0
    %332 = vmatprep.subr.bf16.mxu0 0
    %333 = vmatpush1.bf16.msra.mxu0 0
    %334 = vmatprep.subr.bf16.mxu0 0
    %335 = vmatpush1.bf16.msra.mxu0 0
    %336 = vmatprep.subr.bf16.mxu0 0
    %337 = vmatpush1.bf16.msra.mxu0 0
    %338 = vmatprep.subr.bf16.mxu0 0
    %339 = vmatpush1.bf16.msra.mxu0 0
    %340 = vmatprep.mubr.bf16.mxu0 0
    %341 = vmatmul.mubr.bf16.gmra.mrb[0].mxu0 %v307
    %v342 = vpop.f32.mrb[0].mxu0
    %v343 = vadd.f32 %v126, %v342
    %v344 = vpop.f32.mrb[0].mxu0
    %v345 = vpop.f32.mrb[0].mxu0
    %v346 = vpop.f32.mrb[0].mxu0
    %347 = vdwg.mxu0
    %v348 = vadd.f32 %v306, %v343
    %v349 = vxor.u32 %v348, 2147483648
    %v350 = vmul.f32 %v349, 1.442695
    %v351 = vpow.pop %v350
    %v352 = vadd.f32 %v351, 1.0
    %v353 = vrcp.pop %v352
    %v354 = vmul.f32 1.0, %v353
    %355 = vrot.lane.b32.xlu0 %v354, 64
    %v356 = vpop.permute.xlu0 %355
    %v357 = vmul.f32 %v356, %v343
    %v358 = vadd.f32 %v306, %v357
    %v359 = vtanh.pop %v358
    %360 = vrot.lane.b32.xlu0 %v354, 96
    %v361 = vpop.permute.xlu0 %360
    %362 = vrot.lane.b32.xlu0 %v359, 64
    %v363 = vpop.permute.xlu0 %362
    %v364 = vsub.f32 1.0, %v361
    %v365 = vmul.f32 %v364, %v363
    %v366 = vmul.f32 %v361, %v302
    %v367 = vadd.f32 %v365, %v366
    %v368 = vsel %vm104, %v367, 0.0
    %s369 = scalar_lea.vmem [#allocation2], 16
    %370 = vst [vmem:[%s369] sm:$0xff] %v368
    %s371 = scalar_lea.vmem [#allocation4], 24
    %v372 = vld [vmem:[%s371] sm:$0xff]
    %v373 = vpack.c.bf16 %v368, %v368
    %374 = vmatprep.subr.bf16.mxu0 0
    %375 = vmatpush1.bf16.msra.mxu0 %v161
    %376 = vmatprep.subr.bf16.mxu0 0
    %377 = vmatpush1.bf16.msra.mxu0 %v162
    %378 = vmatprep.subr.bf16.mxu0 0
    %379 = vmatpush1.bf16.msra.mxu0 %v163
    %380 = vmatprep.subr.bf16.mxu0 0
    %381 = vmatpush1.bf16.msra.mxu0 %v164
    %382 = vmatprep.subr.bf16.mxu0 0
    %383 = vmatpush1.bf16.msra.mxu0 %v165
    %384 = vmatprep.subr.bf16.mxu0 0
    %385 = vmatpush1.bf16.msra.mxu0 %v166
    %386 = vmatprep.subr.bf16.mxu0 0
    %387 = vmatpush1.bf16.msra.mxu0 %v167
    %388 = vmatprep.subr.bf16.mxu0 0
    %389 = vmatpush1.bf16.msra.mxu0 %v168
    %390 = vmatprep.subr.bf16.mxu0 0
    %391 = vmatpush1.bf16.msra.mxu0 0
    %392 = vmatprep.subr.bf16.mxu0 0
    %393 = vmatpush1.bf16.msra.mxu0 0
    %394 = vmatprep.subr.bf16.mxu0 0
    %395 = vmatpush1.bf16.msra.mxu0 0
    %396 = vmatprep.subr.bf16.mxu0 0
    %397 = vmatpush1.bf16.msra.mxu0 0
    %398 = vmatprep.subr.bf16.mxu0 0
    %399 = vmatpush1.bf16.msra.mxu0 0
    %400 = vmatprep.subr.bf16.mxu0 0
    %401 = vmatpush1.bf16.msra.mxu0 0
    %402 = vmatprep.subr.bf16.mxu0 0
    %403 = vmatpush1.bf16.msra.mxu0 0
    %404 = vmatprep.subr.bf16.mxu0 0
    %405 = vmatpush1.bf16.msra.mxu0 0
    %406 = vmatprep.mubr.bf16.mxu0 0
    %407 = vmatmul.mubr.bf16.gmra.mrb[0].mxu0 %v373
    %v408 = vpop.f32.mrb[0].mxu0
    %v409 = vadd.f32 %v126, %v408
    %v410 = vpop.f32.mrb[0].mxu0
    %v411 = vpop.f32.mrb[0].mxu0
    %v412 = vpop.f32.mrb[0].mxu0
    %413 = vdwg.mxu0
    %v414 = vadd.f32 %v372, %v409
    %v415 = vxor.u32 %v414, 2147483648
    %v416 = vmul.f32 %v415, 1.442695
    %v417 = vpow.pop %v416
    %v418 = vadd.f32 %v417, 1.0
    %v419 = vrcp.pop %v418
    %v420 = vmul.f32 1.0, %v419
    %421 = vrot.lane.b32.xlu0 %v420, 64
    %v422 = vpop.permute.xlu0 %421
    %v423 = vmul.f32 %v422, %v409
    %v424 = vadd.f32 %v372, %v423
    %v425 = vtanh.pop %v424
    %426 = vrot.lane.b32.xlu0 %v420, 96
    %v427 = vpop.permute.xlu0 %426
    %428 = vrot.lane.b32.xlu0 %v425, 64
    %v429 = vpop.permute.xlu0 %428
    %v430 = vsub.f32 1.0, %v427
    %v431 = vmul.f32 %v430, %v429
    %v432 = vmul.f32 %v427, %v368
    %v433 = vadd.f32 %v431, %v432
    %v434 = vsel %vm104, %v433, 0.0
    %s435 = scalar_lea.vmem [#allocation2], 24
    %436 = vst [vmem:[%s435] sm:$0xff] %v434
    %s437 = scalar_lea.vmem [#allocation4], 32
    %v438 = vld [vmem:[%s437] sm:$0xff]
    %v439 = vpack.c.bf16 %v434, %v434
    %440 = vmatprep.subr.bf16.mxu0 0
    %441 = vmatpush1.bf16.msra.mxu0 %v161
    %442 = vmatprep.subr.bf16.mxu0 0
    %443 = vmatpush1.bf16.msra.mxu0 %v162
    %444 = vmatprep.subr.bf16.mxu0 0
    %445 = vmatpush1.bf16.msra.mxu0 %v163
    %446 = vmatprep.subr.bf16.mxu0 0
    %447 = vmatpush1.bf16.msra.mxu0 %v164
    %448 = vmatprep.subr.bf16.mxu0 0
    %449 = vmatpush1.bf16.msra.mxu0 %v165
    %450 = vmatprep.subr.bf16.mxu0 0
    %451 = vmatpush1.bf16.msra.mxu0 %v166
    %452 = vmatprep.subr.bf16.mxu0 0
    %453 = vmatpush1.bf16.msra.mxu0 %v167
    %454 = vmatprep.subr.bf16.mxu0 0
    %455 = vmatpush1.bf16.msra.mxu0 %v168
    %456 = vmatprep.subr.bf16.mxu0 0
    %457 = vmatpush1.bf16.msra.mxu0 0
    %458 = vmatprep.subr.bf16.mxu0 0
    %459 = vmatpush1.bf16.msra.mxu0 0
    %460 = vmatprep.subr.bf16.mxu0 0
    %461 = vmatpush1.bf16.msra.mxu0 0
    %462 = vmatprep.subr.bf16.mxu0 0
    %463 = vmatpush1.bf16.msra.mxu0 0
    %464 = vmatprep.subr.bf16.mxu0 0
    %465 = vmatpush1.bf16.msra.mxu0 0
    %466 = vmatprep.subr.bf16.mxu0 0
    %467 = vmatpush1.bf16.msra.mxu0 0
    %468 = vmatprep.subr.bf16.mxu0 0
    %469 = vmatpush1.bf16.msra.mxu0 0
    %470 = vmatprep.subr.bf16.mxu0 0
    %471 = vmatpush1.bf16.msra.mxu0 0
    %472 = vmatprep.mubr.bf16.mxu0 0
    %473 = vmatmul.mubr.bf16.gmra.mrb[0].mxu0 %v439
    %v474 = vpop.f32.mrb[0].mxu0
    %v475 = vadd.f32 %v126, %v474
    %v476 = vpop.f32.mrb[0].mxu0
    %v477 = vpop.f32.mrb[0].mxu0
    %v478 = vpop.f32.mrb[0].mxu0
    %479 = vdwg.mxu0
    %v480 = vadd.f32 %v438, %v475
    %v481 = vxor.u32 %v480, 2147483648
    %v482 = vmul.f32 %v481, 1.442695
    %v483 = vpow.pop %v482
    %v484 = vadd.f32 %v483, 1.0
    %v485 = vrcp.pop %v484
    %v486 = vmul.f32 1.0, %v485
    %487 = vrot.lane.b32.xlu0 %v486, 64
    %v488 = vpop.permute.xlu0 %487
    %v489 = vmul.f32 %v488, %v475
    %v490 = vadd.f32 %v438, %v489
    %v491 = vtanh.pop %v490
    %492 = vrot.lane.b32.xlu0 %v486, 96
    %v493 = vpop.permute.xlu0 %492
    %494 = vrot.lane.b32.xlu0 %v491, 64
    %v495 = vpop.permute.xlu0 %494
    %v496 = vsub.f32 1.0, %v493
    %v497 = vmul.f32 %v496, %v495
    %v498 = vmul.f32 %v493, %v434
    %v499 = vadd.f32 %v497, %v498
    %v500 = vsel %vm104, %v499, 0.0
    %s501 = scalar_lea.vmem [#allocation2], 32
    %502 = vst [vmem:[%s501] sm:$0xff] %v500
    %s503 = scalar_lea.vmem [#allocation4], 40
    %v504 = vld [vmem:[%s503] sm:$0xff]
    %v505 = vpack.c.bf16 %v500, %v500
    %506 = vmatprep.subr.bf16.mxu0 0
    %507 = vmatpush1.bf16.msra.mxu0 %v161
    %508 = vmatprep.subr.bf16.mxu0 0
    %509 = vmatpush1.bf16.msra.mxu0 %v162
    %510 = vmatprep.subr.bf16.mxu0 0
    %511 = vmatpush1.bf16.msra.mxu0 %v163
    %512 = vmatprep.subr.bf16.mxu0 0
    %513 = vmatpush1.bf16.msra.mxu0 %v164
    %514 = vmatprep.subr.bf16.mxu0 0
    %515 = vmatpush1.bf16.msra.mxu0 %v165
    %516 = vmatprep.subr.bf16.mxu0 0
    %517 = vmatpush1.bf16.msra.mxu0 %v166
    %518 = vmatprep.subr.bf16.mxu0 0
    %519 = vmatpush1.bf16.msra.mxu0 %v167
    %520 = vmatprep.subr.bf16.mxu0 0
    %521 = vmatpush1.bf16.msra.mxu0 %v168
    %522 = vmatprep.subr.bf16.mxu0 0
    %523 = vmatpush1.bf16.msra.mxu0 0
    %524 = vmatprep.subr.bf16.mxu0 0
    %525 = vmatpush1.bf16.msra.mxu0 0
    %526 = vmatprep.subr.bf16.mxu0 0
    %527 = vmatpush1.bf16.msra.mxu0 0
    %528 = vmatprep.subr.bf16.mxu0 0
    %529 = vmatpush1.bf16.msra.mxu0 0
    %530 = vmatprep.subr.bf16.mxu0 0
    %531 = vmatpush1.bf16.msra.mxu0 0
    %532 = vmatprep.subr.bf16.mxu0 0
    %533 = vmatpush1.bf16.msra.mxu0 0
    %534 = vmatprep.subr.bf16.mxu0 0
    %535 = vmatpush1.bf16.msra.mxu0 0
    %536 = vmatprep.subr.bf16.mxu0 0
    %537 = vmatpush1.bf16.msra.mxu0 0
    %538 = vmatprep.mubr.bf16.mxu0 0
    %539 = vmatmul.mubr.bf16.gmra.mrb[0].mxu0 %v505
    %v540 = vpop.f32.mrb[0].mxu0
    %v541 = vadd.f32 %v126, %v540
    %v542 = vpop.f32.mrb[0].mxu0
    %v543 = vpop.f32.mrb[0].mxu0
    %v544 = vpop.f32.mrb[0].mxu0
    %545 = vdwg.mxu0
    %v546 = vadd.f32 %v504, %v541
    %v547 = vxor.u32 %v546, 2147483648
    %v548 = vmul.f32 %v547, 1.442695
    %v549 = vpow.pop %v548
    %v550 = vadd.f32 %v549, 1.0
    %v551 = vrcp.pop %v550
    %v552 = vmul.f32 1.0, %v551
    %553 = vrot.lane.b32.xlu0 %v552, 64
    %v554 = vpop.permute.xlu0 %553
    %v555 = vmul.f32 %v554, %v541
    %v556 = vadd.f32 %v504, %v555
    %v557 = vtanh.pop %v556
    %558 = vrot.lane.b32.xlu0 %v552, 96
    %v559 = vpop.permute.xlu0 %558
    %560 = vrot.lane.b32.xlu0 %v557, 64
    %v561 = vpop.permute.xlu0 %560
    %v562 = vsub.f32 1.0, %v559
    %v563 = vmul.f32 %v562, %v561
    %v564 = vmul.f32 %v559, %v500
    %v565 = vadd.f32 %v563, %v564
    %v566 = vsel %vm104, %v565, 0.0
    %s567 = scalar_lea.vmem [#allocation2], 40
    %568 = vst [vmem:[%s567] sm:$0xff] %v566
    %s569 = scalar_lea.vmem [#allocation4], 48
    %v570 = vld [vmem:[%s569] sm:$0xff]
    %v571 = vpack.c.bf16 %v566, %v566
    %572 = vmatprep.subr.bf16.mxu0 0
    %573 = vmatpush1.bf16.msra.mxu0 %v161
    %574 = vmatprep.subr.bf16.mxu0 0
    %575 = vmatpush1.bf16.msra.mxu0 %v162
    %576 = vmatprep.subr.bf16.mxu0 0
    %577 = vmatpush1.bf16.msra.mxu0 %v163
    %578 = vmatprep.subr.bf16.mxu0 0
    %579 = vmatpush1.bf16.msra.mxu0 %v164
    %580 = vmatprep.subr.bf16.mxu0 0
    %581 = vmatpush1.bf16.msra.mxu0 %v165
    %582 = vmatprep.subr.bf16.mxu0 0
    %583 = vmatpush1.bf16.msra.mxu0 %v166
    %584 = vmatprep.subr.bf16.mxu0 0
    %585 = vmatpush1.bf16.msra.mxu0 %v167
    %586 = vmatprep.subr.bf16.mxu0 0
    %587 = vmatpush1.bf16.msra.mxu0 %v168
    %588 = vmatprep.subr.bf16.mxu0 0
    %589 = vmatpush1.bf16.msra.mxu0 0
    %590 = vmatprep.subr.bf16.mxu0 0
    %591 = vmatpush1.bf16.msra.mxu0 0
    %592 = vmatprep.subr.bf16.mxu0 0
    %593 = vmatpush1.bf16.msra.mxu0 0
    %594 = vmatprep.subr.bf16.mxu0 0
    %595 = vmatpush1.bf16.msra.mxu0 0
    %596 = vmatprep.subr.bf16.mxu0 0
    %597 = vmatpush1.bf16.msra.mxu0 0
    %598 = vmatprep.subr.bf16.mxu0 0
    %599 = vmatpush1.bf16.msra.mxu0 0
    %600 = vmatprep.subr.bf16.mxu0 0
    %601 = vmatpush1.bf16.msra.mxu0 0
    %602 = vmatprep.subr.bf16.mxu0 0
    %603 = vmatpush1.bf16.msra.mxu0 0
    %604 = vmatprep.mubr.bf16.mxu0 0
    %605 = vmatmul.mubr.bf16.gmra.mrb[0].mxu0 %v571
    %v606 = vpop.f32.mrb[0].mxu0
    %v607 = vadd.f32 %v126, %v606
    %v608 = vpop.f32.mrb[0].mxu0
    %v609 = vpop.f32.mrb[0].mxu0
    %v610 = vpop.f32.mrb[0].mxu0
    %611 = vdwg.mxu0
    %v612 = vadd.f32 %v570, %v607
    %v613 = vxor.u32 %v612, 2147483648
    %v614 = vmul.f32 %v613, 1.442695
    %v615 = vpow.pop %v614
    %v616 = vadd.f32 %v615, 1.0
    %v617 = vrcp.pop %v616
    %v618 = vmul.f32 1.0, %v617
    %619 = vrot.lane.b32.xlu0 %v618, 64
    %v620 = vpop.permute.xlu0 %619
    %v621 = vmul.f32 %v620, %v607
    %v622 = vadd.f32 %v570, %v621
    %v623 = vtanh.pop %v622
    %624 = vrot.lane.b32.xlu0 %v618, 96
    %v625 = vpop.permute.xlu0 %624
    %626 = vrot.lane.b32.xlu0 %v623, 64
    %v627 = vpop.permute.xlu0 %626
    %v628 = vsub.f32 1.0, %v625
    %v629 = vmul.f32 %v628, %v627
    %v630 = vmul.f32 %v625, %v566
    %v631 = vadd.f32 %v629, %v630
    %v632 = vsel %vm104, %v631, 0.0
    %s633 = scalar_lea.vmem [#allocation2], 48
    %634 = vst [vmem:[%s633] sm:$0xff] %v632
    %s635 = scalar_lea.vmem [#allocation4], 56
    %v636 = vld [vmem:[%s635] sm:$0xff]
    %v637 = vpack.c.bf16 %v632, %v632
    %638 = vmatprep.subr.bf16.mxu0 0
    %639 = vmatpush1.bf16.msra.mxu0 %v161
    %640 = vmatprep.subr.bf16.mxu0 0
    %641 = vmatpush1.bf16.msra.mxu0 %v162
    %642 = vmatprep.subr.bf16.mxu0 0
    %643 = vmatpush1.bf16.msra.mxu0 %v163
    %644 = vmatprep.subr.bf16.mxu0 0
    %645 = vmatpush1.bf16.msra.mxu0 %v164
    %646 = vmatprep.subr.bf16.mxu0 0
    %647 = vmatpush1.bf16.msra.mxu0 %v165
    %648 = vmatprep.subr.bf16.mxu0 0
    %649 = vmatpush1.bf16.msra.mxu0 %v166
    %650 = vmatprep.subr.bf16.mxu0 0
    %651 = vmatpush1.bf16.msra.mxu0 %v167
    %652 = vmatprep.subr.bf16.mxu0 0
    %653 = vmatpush1.bf16.msra.mxu0 %v168
    %654 = vmatprep.subr.bf16.mxu0 0
    %655 = vmatpush1.bf16.msra.mxu0 0
    %656 = vmatprep.subr.bf16.mxu0 0
    %657 = vmatpush1.bf16.msra.mxu0 0
    %658 = vmatprep.subr.bf16.mxu0 0
    %659 = vmatpush1.bf16.msra.mxu0 0
    %660 = vmatprep.subr.bf16.mxu0 0
    %661 = vmatpush1.bf16.msra.mxu0 0
    %662 = vmatprep.subr.bf16.mxu0 0
    %663 = vmatpush1.bf16.msra.mxu0 0
    %664 = vmatprep.subr.bf16.mxu0 0
    %665 = vmatpush1.bf16.msra.mxu0 0
    %666 = vmatprep.subr.bf16.mxu0 0
    %667 = vmatpush1.bf16.msra.mxu0 0
    %668 = vmatprep.subr.bf16.mxu0 0
    %669 = vmatpush1.bf16.msra.mxu0 0
    %670 = vmatprep.mubr.bf16.mxu0 0
    %671 = vmatmul.mubr.bf16.gmra.mrb[0].mxu0 %v637
    %v672 = vpop.f32.mrb[0].mxu0
    %v673 = vadd.f32 %v126, %v672
    %v674 = vpop.f32.mrb[0].mxu0
    %v675 = vpop.f32.mrb[0].mxu0
    %v676 = vpop.f32.mrb[0].mxu0
    %677 = vdwg.mxu0
    %v678 = vadd.f32 %v636, %v673
    %v679 = vxor.u32 %v678, 2147483648
    %v680 = vmul.f32 %v679, 1.442695
    %v681 = vpow.pop %v680
    %v682 = vadd.f32 %v681, 1.0
    %v683 = vrcp.pop %v682
    %v684 = vmul.f32 1.0, %v683
    %685 = vrot.lane.b32.xlu0 %v684, 64
    %v686 = vpop.permute.xlu0 %685
    %v687 = vmul.f32 %v686, %v673
    %v688 = vadd.f32 %v636, %v687
    %v689 = vtanh.pop %v688
    %690 = vrot.lane.b32.xlu0 %v684, 96
    %v691 = vpop.permute.xlu0 %690
    %692 = vrot.lane.b32.xlu0 %v689, 64
    %v693 = vpop.permute.xlu0 %692
    %v694 = vsub.f32 1.0, %v691
    %v695 = vmul.f32 %v694, %v693
    %v696 = vmul.f32 %v691, %v632
    %v697 = vadd.f32 %v695, %v696
    %v698 = vsel %vm104, %v697, 0.0
    %s699 = scalar_lea.vmem [#allocation2], 56
    %700 = vst [vmem:[%s699] sm:$0xff] %v698
    %v701 = vld [vmem:[#allocation2] sm:$0xff]
    %v702 = vld [vmem:[#allocation2 + $0x8] sm:$0xff]
    %v703 = vld [vmem:[#allocation2 + $0x10] sm:$0xff]
    %v704 = vld [vmem:[#allocation2 + $0x18] sm:$0xff]
    %v705 = vld [vmem:[#allocation2 + $0x20] sm:$0xff]
    %v706 = vld [vmem:[#allocation2 + $0x28] sm:$0xff]
    %v707 = vld [vmem:[#allocation2 + $0x30] sm:$0xff]
    %v708 = vld [vmem:[#allocation2 + $0x38] sm:$0xff]
    %v709 = vpack.c.bf16 %v702, %v701
    %v710 = vpack.c.bf16 %v704, %v703
    %v711 = vpack.c.bf16 %v706, %v705
    %v712 = vpack.c.bf16 %v708, %v707
    %v713 = vld [vmem:[#allocation9] sm:$0xf]
    %v714 = vld [vmem:[#allocation9 + $0x4] sm:$0xf]
    %v715 = vld [vmem:[#allocation9 + $0x8] sm:$0xf]
    %v716 = vld [vmem:[#allocation9 + $0xc] sm:$0xf]
    %v717 = vld [vmem:[#allocation9 + $0x10] sm:$0xf]
    %v718 = vld [vmem:[#allocation9 + $0x14] sm:$0xf]
    %v719 = vld [vmem:[#allocation9 + $0x18] sm:$0xf]
    %v720 = vld [vmem:[#allocation9 + $0x1c] sm:$0xf]
    %v721 = vld [vmem:[#allocation9 + $0x20] sm:$0xf]
    %v722 = vld [vmem:[#allocation9 + $0x24] sm:$0xf]
    %v723 = vld [vmem:[#allocation9 + $0x28] sm:$0xf]
    %v724 = vld [vmem:[#allocation9 + $0x2c] sm:$0xf]
    %v725 = vld [vmem:[#allocation9 + $0x30] sm:$0xf]
    %v726 = vld [vmem:[#allocation9 + $0x34] sm:$0xf]
    %v727 = vld [vmem:[#allocation9 + $0x38] sm:$0xf]
    %v728 = vld [vmem:[#allocation9 + $0x3c] sm:$0xf]
    %v729 = vld [vmem:[%s4] sm:$0x1]
    %v731 = vlaneseq
    %v732 = vshrl.u32 %v731, 7
    %v733 = vsub.s32 0, %v732
    %v734 = vrot.slane %v729, %v733
    %v752 = vunpack.c.l.b16 %v713
    %v753 = vunpack.c.l.b16 %v714
    %v754 = vunpack.c.l.b16 %v715
    %v755 = vunpack.c.l.b16 %v716
    %v756 = vunpack.c.l.b16 %v717
    %v757 = vunpack.c.l.b16 %v718
    %v758 = vunpack.c.l.b16 %v719
    %v759 = vunpack.c.l.b16 %v720
    %v760 = vunpack.c.l.b16 %v721
    %v761 = vunpack.c.l.b16 %v722
    %v762 = vunpack.c.l.b16 %v723
    %v763 = vunpack.c.l.b16 %v724
    %v764 = vunpack.c.l.b16 %v725
    %v765 = vunpack.c.l.b16 %v726
    %v766 = vunpack.c.l.b16 %v727
    %v767 = vunpack.c.l.b16 %v728
    %v768 = vpack.c.b16 %v753, %v752
    %v769 = vpack.c.b16 %v755, %v754
    %v770 = vpack.c.b16 %v757, %v756
    %v771 = vpack.c.b16 %v759, %v758
    %v772 = vpack.c.b16 %v761, %v760
    %v773 = vpack.c.b16 %v763, %v762
    %v774 = vpack.c.b16 %v765, %v764
    %v775 = vpack.c.b16 %v767, %v766
    %784 = vmatprep.subr.bf16.mxu0 0
    %785 = vmatpush1.bf16.msra.mxu0 %v768
    %786 = vmatprep.subr.bf16.mxu0 0
    %787 = vmatpush1.bf16.msra.mxu0 %v769
    %788 = vmatprep.subr.bf16.mxu0 0
    %789 = vmatpush1.bf16.msra.mxu0 %v770
    %790 = vmatprep.subr.bf16.mxu0 0
    %791 = vmatpush1.bf16.msra.mxu0 %v771
    %792 = vmatprep.subr.bf16.mxu0 0
    %793 = vmatpush1.bf16.msra.mxu0 %v772
    %794 = vmatprep.subr.bf16.mxu0 0
    %795 = vmatpush1.bf16.msra.mxu0 %v773
    %796 = vmatprep.subr.bf16.mxu0 0
    %797 = vmatpush1.bf16.msra.mxu0 %v774
    %798 = vmatprep.subr.bf16.mxu0 0
    %799 = vmatpush1.bf16.msra.mxu0 %v775
    %800 = vmatprep.subr.bf16.mxu0 0
    %801 = vmatpush1.bf16.msra.mxu0 0
    %802 = vmatprep.subr.bf16.mxu0 0
    %803 = vmatpush1.bf16.msra.mxu0 0
    %804 = vmatprep.subr.bf16.mxu0 0
    %805 = vmatpush1.bf16.msra.mxu0 0
    %806 = vmatprep.subr.bf16.mxu0 0
    %807 = vmatpush1.bf16.msra.mxu0 0
    %808 = vmatprep.subr.bf16.mxu0 0
    %809 = vmatpush1.bf16.msra.mxu0 0
    %810 = vmatprep.subr.bf16.mxu0 0
    %811 = vmatpush1.bf16.msra.mxu0 0
    %812 = vmatprep.subr.bf16.mxu0 0
    %813 = vmatpush1.bf16.msra.mxu0 0
    %814 = vmatprep.subr.bf16.mxu0 0
    %815 = vmatpush1.bf16.msra.mxu0 0
    %816 = vmatprep.mubr.bf16.mxu0 0
    %817 = vmatmul.mubr.bf16.gmra.mrb[0].mxu0 %v709
    %v818 = vpop.f32.mrb[0].mxu0
    %v819 = vadd.f32 %v734, %v818
    %v820 = vpop.f32.mrb[0].mxu0
    %v821 = vpop.f32.mrb[0].mxu0
    %v822 = vadd.f32 %v734, %v821
    %v823 = vpop.f32.mrb[0].mxu0
    %824 = vmatprep.mubr.bf16.mxu0 0
    %825 = vmatmul.mubr.bf16.gmra.mrb[0].mxu0 %v710
    %v826 = vpop.f32.mrb[0].mxu0
    %v827 = vadd.f32 %v734, %v826
    %v828 = vpop.f32.mrb[0].mxu0
    %v829 = vpop.f32.mrb[0].mxu0
    %v830 = vadd.f32 %v734, %v829
    %v831 = vpop.f32.mrb[0].mxu0
    %832 = vmatprep.mubr.bf16.mxu0 0
    %833 = vmatmul.mubr.bf16.gmra.mrb[0].mxu0 %v711
    %v834 = vpop.f32.mrb[0].mxu0
    %v835 = vadd.f32 %v734, %v834
    %v836 = vpop.f32.mrb[0].mxu0
    %v837 = vpop.f32.mrb[0].mxu0
    %v838 = vadd.f32 %v734, %v837
    %v839 = vpop.f32.mrb[0].mxu0
    %840 = vmatprep.mubr.bf16.mxu0 0
    %841 = vmatmul.mubr.bf16.gmra.mrb[0].mxu0 %v712
    %v842 = vpop.f32.mrb[0].mxu0
    %v843 = vadd.f32 %v734, %v842
    %v844 = vpop.f32.mrb[0].mxu0
    %v845 = vpop.f32.mrb[0].mxu0
    %v846 = vadd.f32 %v734, %v845
    %v847 = vpop.f32.mrb[0].mxu0
    %848 = vdwg.mxu0
    %849 = vst [vmem:[#allocation3] sm:$0xff] %v819
    %850 = vst [vmem:[#allocation3 + $0x8] sm:$0xff] %v822
    %851 = vst [vmem:[#allocation3 + $0x10] sm:$0xff] %v827
    %852 = vst [vmem:[#allocation3 + $0x18] sm:$0xff] %v830
    %853 = vst [vmem:[#allocation3 + $0x20] sm:$0xff] %v835
    %854 = vst [vmem:[#allocation3 + $0x28] sm:$0xff] %v838
    %855 = vst [vmem:[#allocation3 + $0x30] sm:$0xff] %v843
    %856 = vst [vmem:[#allocation3 + $0x38] sm:$0xff] %v846
    %v857 = vld [vmem:[#allocation10] sm:$0xf]
    %v858 = vld [vmem:[#allocation10 + $0x4] sm:$0xf]
    %v859 = vld [vmem:[#allocation10 + $0x8] sm:$0xf]
    %v860 = vld [vmem:[#allocation10 + $0xc] sm:$0xf]
    %v861 = vld [vmem:[#allocation10 + $0x10] sm:$0xf]
    %v862 = vld [vmem:[#allocation10 + $0x14] sm:$0xf]
    %v863 = vld [vmem:[#allocation10 + $0x18] sm:$0xf]
    %v864 = vld [vmem:[#allocation10 + $0x1c] sm:$0xf]
    %v865 = vld [vmem:[#allocation10 + $0x20] sm:$0xf]
    %v866 = vld [vmem:[#allocation10 + $0x24] sm:$0xf]
    %v867 = vld [vmem:[#allocation10 + $0x28] sm:$0xf]
    %v868 = vld [vmem:[#allocation10 + $0x2c] sm:$0xf]
    %v869 = vld [vmem:[#allocation10 + $0x30] sm:$0xf]
    %v870 = vld [vmem:[#allocation10 + $0x34] sm:$0xf]
    %v871 = vld [vmem:[#allocation10 + $0x38] sm:$0xf]
    %v872 = vld [vmem:[#allocation10 + $0x3c] sm:$0xf]
    %v873 = vld [vmem:[%s6] sm:$0x1]
    %v875 = vlaneseq
    %v876 = vshrl.u32 %v875, 7
    %v877 = vsub.s32 0, %v876
    %v878 = vrot.slane %v873, %v877
    %v880 = vld [vmem:[#allocation3] sm:$0xff]
    %v897 = vunpack.c.l.b16 %v857
    %v898 = vunpack.c.l.b16 %v858
    %v899 = vunpack.c.l.b16 %v859
    %v900 = vunpack.c.l.b16 %v860
    %v901 = vunpack.c.l.b16 %v861
    %v902 = vunpack.c.l.b16 %v862
    %v903 = vunpack.c.l.b16 %v863
    %v904 = vunpack.c.l.b16 %v864
    %v905 = vunpack.c.l.b16 %v865
    %v906 = vunpack.c.l.b16 %v866
    %v907 = vunpack.c.l.b16 %v867
    %v908 = vunpack.c.l.b16 %v868
    %v909 = vunpack.c.l.b16 %v869
    %v910 = vunpack.c.l.b16 %v870
    %v911 = vunpack.c.l.b16 %v871
    %v912 = vunpack.c.l.b16 %v872
    %v913 = vpack.c.b16 %v898, %v897
    %v914 = vpack.c.b16 %v900, %v899
    %v915 = vpack.c.b16 %v902, %v901
    %v916 = vpack.c.b16 %v904, %v903
    %v917 = vpack.c.b16 %v906, %v905
    %v918 = vpack.c.b16 %v908, %v907
    %v919 = vpack.c.b16 %v910, %v909
    %v920 = vpack.c.b16 %v912, %v911
    %929 = vmatprep.subr.bf16.mxu0 0
    %930 = vmatpush1.bf16.msra.mxu0 %v913
    %931 = vmatprep.subr.bf16.mxu0 0
    %932 = vmatpush1.bf16.msra.mxu0 %v914
    %933 = vmatprep.subr.bf16.mxu0 0
    %934 = vmatpush1.bf16.msra.mxu0 %v915
    %935 = vmatprep.subr.bf16.mxu0 0
    %936 = vmatpush1.bf16.msra.mxu0 %v916
    %937 = vmatprep.subr.bf16.mxu0 0
    %938 = vmatpush1.bf16.msra.mxu0 %v917
    %939 = vmatprep.subr.bf16.mxu0 0
    %940 = vmatpush1.bf16.msra.mxu0 %v918
    %941 = vmatprep.subr.bf16.mxu0 0
    %942 = vmatpush1.bf16.msra.mxu0 %v919
    %943 = vmatprep.subr.bf16.mxu0 0
    %944 = vmatpush1.bf16.msra.mxu0 %v920
    %945 = vmatprep.subr.bf16.mxu0 0
    %946 = vmatpush1.bf16.msra.mxu0 0
    %947 = vmatprep.subr.bf16.mxu0 0
    %948 = vmatpush1.bf16.msra.mxu0 0
    %949 = vmatprep.subr.bf16.mxu0 0
    %950 = vmatpush1.bf16.msra.mxu0 0
    %951 = vmatprep.subr.bf16.mxu0 0
    %952 = vmatpush1.bf16.msra.mxu0 0
    %953 = vmatprep.subr.bf16.mxu0 0
    %954 = vmatpush1.bf16.msra.mxu0 0
    %955 = vmatprep.subr.bf16.mxu0 0
    %956 = vmatpush1.bf16.msra.mxu0 0
    %957 = vmatprep.subr.bf16.mxu0 0
    %958 = vmatpush1.bf16.msra.mxu0 0
    %959 = vmatprep.subr.bf16.mxu0 0
    %960 = vmatpush1.bf16.msra.mxu0 0
    %961 = vmatprep.mubr.bf16.mxu0 0
    %962 = vmatmul.mubr.bf16.gmra.mrb[0].mxu0 0
    %v963 = vpop.f32.mrb[0].mxu0
    %v964 = vadd.f32 %v878, %v963
    %v965 = vpop.f32.mrb[0].mxu0
    %v966 = vpop.f32.mrb[0].mxu0
    %v967 = vpop.f32.mrb[0].mxu0
    %968 = vdwg.mxu0
    %v969 = vadd.f32 %v880, %v964
    %v970 = vxor.u32 %v969, 2147483648
    %v971 = vmul.f32 %v970, 1.442695
    %v972 = vpow.pop %v971
    %v973 = vadd.f32 %v972, 1.0
    %v974 = vrcp.pop %v973
    %v975 = vmul.f32 1.0, %v974
    %976 = vrot.lane.b32.xlu0 %v975, 64
    %v977 = vpop.permute.xlu0 %976
    %v978 = vmul.f32 %v977, %v964
    %v979 = vadd.f32 %v880, %v978
    %v980 = vtanh.pop %v979
    %981 = vrot.lane.b32.xlu0 %v975, 96
    %v982 = vpop.permute.xlu0 %981
    %983 = vrot.lane.b32.xlu0 %v980, 64
    %v984 = vpop.permute.xlu0 %983
    %v985 = vsub.f32 1.0, %v982
    %v986 = vmul.f32 %v985, %v984
    %v987 = vmul.f32 %v982, 0.0
    %v988 = vadd.f32 %v986, %v987
    %v989 = vsel %vm104, %v988, 0.0
    %990 = vst [vmem:[#allocation2] sm:$0xff] %v989
    %s991 = scalar_lea.vmem [#allocation3], 8
    %v992 = vld [vmem:[%s991] sm:$0xff]
    %v993 = vpack.c.bf16 %v989, %v989
    %994 = vmatprep.subr.bf16.mxu0 0
    %995 = vmatpush1.bf16.msra.mxu0 %v913
    %996 = vmatprep.subr.bf16.mxu0 0
    %997 = vmatpush1.bf16.msra.mxu0 %v914
    %998 = vmatprep.subr.bf16.mxu0 0
    %999 = vmatpush1.bf16.msra.mxu0 %v915
    %1000 = vmatprep.subr.bf16.mxu0 0
    %1001 = vmatpush1.bf16.msra.mxu0 %v916
    %1002 = vmatprep.subr.bf16.mxu0 0
    %1003 = vmatpush1.bf16.msra.mxu0 %v917
    %1004 = vmatprep.subr.bf16.mxu0 0
    %1005 = vmatpush1.bf16.msra.mxu0 %v918
    %1006 = vmatprep.subr.bf16.mxu0 0
    %1007 = vmatpush1.bf16.msra.mxu0 %v919
    %1008 = vmatprep.subr.bf16.mxu0 0
    %1009 = vmatpush1.bf16.msra.mxu0 %v920
    %1010 = vmatprep.subr.bf16.mxu0 0
    %1011 = vmatpush1.bf16.msra.mxu0 0
    %1012 = vmatprep.subr.bf16.mxu0 0
    %1013 = vmatpush1.bf16.msra.mxu0 0
    %1014 = vmatprep.subr.bf16.mxu0 0
    %1015 = vmatpush1.bf16.msra.mxu0 0
    %1016 = vmatprep.subr.bf16.mxu0 0
    %1017 = vmatpush1.bf16.msra.mxu0 0
    %1018 = vmatprep.subr.bf16.mxu0 0
    %1019 = vmatpush1.bf16.msra.mxu0 0
    %1020 = vmatprep.subr.bf16.mxu0 0
    %1021 = vmatpush1.bf16.msra.mxu0 0
    %1022 = vmatprep.subr.bf16.mxu0 0
    %1023 = vmatpush1.bf16.msra.mxu0 0
    %1024 = vmatprep.subr.bf16.mxu0 0
    %1025 = vmatpush1.bf16.msra.mxu0 0
    %1026 = vmatprep.mubr.bf16.mxu0 0
    %1027 = vmatmul.mubr.bf16.gmra.mrb[0].mxu0 %v993
    %v1028 = vpop.f32.mrb[0].mxu0
    %v1029 = vadd.f32 %v878, %v1028
    %v1030 = vpop.f32.mrb[0].mxu0
    %v1031 = vpop.f32.mrb[0].mxu0
    %v1032 = vpop.f32.mrb[0].mxu0
    %1033 = vdwg.mxu0
    %v1034 = vadd.f32 %v992, %v1029
    %v1035 = vxor.u32 %v1034, 2147483648
    %v1036 = vmul.f32 %v1035, 1.442695
    %v1037 = vpow.pop %v1036
    %v1038 = vadd.f32 %v1037, 1.0
    %v1039 = vrcp.pop %v1038
    %v1040 = vmul.f32 1.0, %v1039
    %1041 = vrot.lane.b32.xlu0 %v1040, 64
    %v1042 = vpop.permute.xlu0 %1041
    %v1043 = vmul.f32 %v1042, %v1029
    %v1044 = vadd.f32 %v992, %v1043
    %v1045 = vtanh.pop %v1044
    %1046 = vrot.lane.b32.xlu0 %v1040, 96
    %v1047 = vpop.permute.xlu0 %1046
    %1048 = vrot.lane.b32.xlu0 %v1045, 64
    %v1049 = vpop.permute.xlu0 %1048
    %v1050 = vsub.f32 1.0, %v1047
    %v1051 = vmul.f32 %v1050, %v1049
    %v1052 = vmul.f32 %v1047, %v989
    %v1053 = vadd.f32 %v1051, %v1052
    %v1054 = vsel %vm104, %v1053, 0.0
    %1055 = vst [vmem:[%s303] sm:$0xff] %v1054
    %s1056 = scalar_lea.vmem [#allocation3], 16
    %v1057 = vld [vmem:[%s1056] sm:$0xff]
    %v1058 = vpack.c.bf16 %v1054, %v1054
    %1059 = vmatprep.subr.bf16.mxu0 0
    %1060 = vmatpush1.bf16.msra.mxu0 %v913
    %1061 = vmatprep.subr.bf16.mxu0 0
    %1062 = vmatpush1.bf16.msra.mxu0 %v914
    %1063 = vmatprep.subr.bf16.mxu0 0
    %1064 = vmatpush1.bf16.msra.mxu0 %v915
    %1065 = vmatprep.subr.bf16.mxu0 0
    %1066 = vmatpush1.bf16.msra.mxu0 %v916
    %1067 = vmatprep.subr.bf16.mxu0 0
    %1068 = vmatpush1.bf16.msra.mxu0 %v917
    %1069 = vmatprep.subr.bf16.mxu0 0
    %1070 = vmatpush1.bf16.msra.mxu0 %v918
    %1071 = vmatprep.subr.bf16.mxu0 0
    %1072 = vmatpush1.bf16.msra.mxu0 %v919
    %1073 = vmatprep.subr.bf16.mxu0 0
    %1074 = vmatpush1.bf16.msra.mxu0 %v920
    %1075 = vmatprep.subr.bf16.mxu0 0
    %1076 = vmatpush1.bf16.msra.mxu0 0
    %1077 = vmatprep.subr.bf16.mxu0 0
    %1078 = vmatpush1.bf16.msra.mxu0 0
    %1079 = vmatprep.subr.bf16.mxu0 0
    %1080 = vmatpush1.bf16.msra.mxu0 0
    %1081 = vmatprep.subr.bf16.mxu0 0
    %1082 = vmatpush1.bf16.msra.mxu0 0
    %1083 = vmatprep.subr.bf16.mxu0 0
    %1084 = vmatpush1.bf16.msra.mxu0 0
    %1085 = vmatprep.subr.bf16.mxu0 0
    %1086 = vmatpush1.bf16.msra.mxu0 0
    %1087 = vmatprep.subr.bf16.mxu0 0
    %1088 = vmatpush1.bf16.msra.mxu0 0
    %1089 = vmatprep.subr.bf16.mxu0 0
    %1090 = vmatpush1.bf16.msra.mxu0 0
    %1091 = vmatprep.mubr.bf16.mxu0 0
    %1092 = vmatmul.mubr.bf16.gmra.mrb[0].mxu0 %v1058
    %v1093 = vpop.f32.mrb[0].mxu0
    %v1094 = vadd.f32 %v878, %v1093
    %v1095 = vpop.f32.mrb[0].mxu0
    %v1096 = vpop.f32.mrb[0].mxu0
    %v1097 = vpop.f32.mrb[0].mxu0
    %1098 = vdwg.mxu0
    %v1099 = vadd.f32 %v1057, %v1094
    %v1100 = vxor.u32 %v1099, 2147483648
    %v1101 = vmul.f32 %v1100, 1.442695
    %v1102 = vpow.pop %v1101
    %v1103 = vadd.f32 %v1102, 1.0
    %v1104 = vrcp.pop %v1103
    %v1105 = vmul.f32 1.0, %v1104
    %1106 = vrot.lane.b32.xlu0 %v1105, 64
    %v1107 = vpop.permute.xlu0 %1106
    %v1108 = vmul.f32 %v1107, %v1094
    %v1109 = vadd.f32 %v1057, %v1108
    %v1110 = vtanh.pop %v1109
    %1111 = vrot.lane.b32.xlu0 %v1105, 96
    %v1112 = vpop.permute.xlu0 %1111
    %1113 = vrot.lane.b32.xlu0 %v1110, 64
    %v1114 = vpop.permute.xlu0 %1113
    %v1115 = vsub.f32 1.0, %v1112
    %v1116 = vmul.f32 %v1115, %v1114
    %v1117 = vmul.f32 %v1112, %v1054
    %v1118 = vadd.f32 %v1116, %v1117
    %v1119 = vsel %vm104, %v1118, 0.0
    %1120 = vst [vmem:[%s369] sm:$0xff] %v1119
    %s1121 = scalar_lea.vmem [#allocation3], 24
    %v1122 = vld [vmem:[%s1121] sm:$0xff]
    %v1123 = vpack.c.bf16 %v1119, %v1119
    %1124 = vmatprep.subr.bf16.mxu0 0
    %1125 = vmatpush1.bf16.msra.mxu0 %v913
    %1126 = vmatprep.subr.bf16.mxu0 0
    %1127 = vmatpush1.bf16.msra.mxu0 %v914
    %1128 = vmatprep.subr.bf16.mxu0 0
    %1129 = vmatpush1.bf16.msra.mxu0 %v915
    %1130 = vmatprep.subr.bf16.mxu0 0
    %1131 = vmatpush1.bf16.msra.mxu0 %v916
    %1132 = vmatprep.subr.bf16.mxu0 0
    %1133 = vmatpush1.bf16.msra.mxu0 %v917
    %1134 = vmatprep.subr.bf16.mxu0 0
    %1135 = vmatpush1.bf16.msra.mxu0 %v918
    %1136 = vmatprep.subr.bf16.mxu0 0
    %1137 = vmatpush1.bf16.msra.mxu0 %v919
    %1138 = vmatprep.subr.bf16.mxu0 0
    %1139 = vmatpush1.bf16.msra.mxu0 %v920
    %1140 = vmatprep.subr.bf16.mxu0 0
    %1141 = vmatpush1.bf16.msra.mxu0 0
    %1142 = vmatprep.subr.bf16.mxu0 0
    %1143 = vmatpush1.bf16.msra.mxu0 0
    %1144 = vmatprep.subr.bf16.mxu0 0
    %1145 = vmatpush1.bf16.msra.mxu0 0
    %1146 = vmatprep.subr.bf16.mxu0 0
    %1147 = vmatpush1.bf16.msra.mxu0 0
    %1148 = vmatprep.subr.bf16.mxu0 0
    %1149 = vmatpush1.bf16.msra.mxu0 0
    %1150 = vmatprep.subr.bf16.mxu0 0
    %1151 = vmatpush1.bf16.msra.mxu0 0
    %1152 = vmatprep.subr.bf16.mxu0 0
    %1153 = vmatpush1.bf16.msra.mxu0 0
    %1154 = vmatprep.subr.bf16.mxu0 0
    %1155 = vmatpush1.bf16.msra.mxu0 0
    %1156 = vmatprep.mubr.bf16.mxu0 0
    %1157 = vmatmul.mubr.bf16.gmra.mrb[0].mxu0 %v1123
    %v1158 = vpop.f32.mrb[0].mxu0
    %v1159 = vadd.f32 %v878, %v1158
    %v1160 = vpop.f32.mrb[0].mxu0
    %v1161 = vpop.f32.mrb[0].mxu0
    %v1162 = vpop.f32.mrb[0].mxu0
    %1163 = vdwg.mxu0
    %v1164 = vadd.f32 %v1122, %v1159
    %v1165 = vxor.u32 %v1164, 2147483648
    %v1166 = vmul.f32 %v1165, 1.442695
    %v1167 = vpow.pop %v1166
    %v1168 = vadd.f32 %v1167, 1.0
    %v1169 = vrcp.pop %v1168
    %v1170 = vmul.f32 1.0, %v1169
    %1171 = vrot.lane.b32.xlu0 %v1170, 64
    %v1172 = vpop.permute.xlu0 %1171
    %v1173 = vmul.f32 %v1172, %v1159
    %v1174 = vadd.f32 %v1122, %v1173
    %v1175 = vtanh.pop %v1174
    %1176 = vrot.lane.b32.xlu0 %v1170, 96
    %v1177 = vpop.permute.xlu0 %1176
    %1178 = vrot.lane.b32.xlu0 %v1175, 64
    %v1179 = vpop.permute.xlu0 %1178
    %v1180 = vsub.f32 1.0, %v1177
    %v1181 = vmul.f32 %v1180, %v1179
    %v1182 = vmul.f32 %v1177, %v1119
    %v1183 = vadd.f32 %v1181, %v1182
    %v1184 = vsel %vm104, %v1183, 0.0
    %1185 = vst [vmem:[%s435] sm:$0xff] %v1184
    %s1186 = scalar_lea.vmem [#allocation3], 32
    %v1187 = vld [vmem:[%s1186] sm:$0xff]
    %v1188 = vpack.c.bf16 %v1184, %v1184
    %1189 = vmatprep.subr.bf16.mxu0 0
    %1190 = vmatpush1.bf16.msra.mxu0 %v913
    %1191 = vmatprep.subr.bf16.mxu0 0
    %1192 = vmatpush1.bf16.msra.mxu0 %v914
    %1193 = vmatprep.subr.bf16.mxu0 0
    %1194 = vmatpush1.bf16.msra.mxu0 %v915
    %1195 = vmatprep.subr.bf16.mxu0 0
    %1196 = vmatpush1.bf16.msra.mxu0 %v916
    %1197 = vmatprep.subr.bf16.mxu0 0
    %1198 = vmatpush1.bf16.msra.mxu0 %v917
    %1199 = vmatprep.subr.bf16.mxu0 0
    %1200 = vmatpush1.bf16.msra.mxu0 %v918
    %1201 = vmatprep.subr.bf16.mxu0 0
    %1202 = vmatpush1.bf16.msra.mxu0 %v919
    %1203 = vmatprep.subr.bf16.mxu0 0
    %1204 = vmatpush1.bf16.msra.mxu0 %v920
    %1205 = vmatprep.subr.bf16.mxu0 0
    %1206 = vmatpush1.bf16.msra.mxu0 0
    %1207 = vmatprep.subr.bf16.mxu0 0
    %1208 = vmatpush1.bf16.msra.mxu0 0
    %1209 = vmatprep.subr.bf16.mxu0 0
    %1210 = vmatpush1.bf16.msra.mxu0 0
    %1211 = vmatprep.subr.bf16.mxu0 0
    %1212 = vmatpush1.bf16.msra.mxu0 0
    %1213 = vmatprep.subr.bf16.mxu0 0
    %1214 = vmatpush1.bf16.msra.mxu0 0
    %1215 = vmatprep.subr.bf16.mxu0 0
    %1216 = vmatpush1.bf16.msra.mxu0 0
    %1217 = vmatprep.subr.bf16.mxu0 0
    %1218 = vmatpush1.bf16.msra.mxu0 0
    %1219 = vmatprep.subr.bf16.mxu0 0
    %1220 = vmatpush1.bf16.msra.mxu0 0
    %1221 = vmatprep.mubr.bf16.mxu0 0
    %1222 = vmatmul.mubr.bf16.gmra.mrb[0].mxu0 %v1188
    %v1223 = vpop.f32.mrb[0].mxu0
    %v1224 = vadd.f32 %v878, %v1223
    %v1225 = vpop.f32.mrb[0].mxu0
    %v1226 = vpop.f32.mrb[0].mxu0
    %v1227 = vpop.f32.mrb[0].mxu0
    %1228 = vdwg.mxu0
    %v1229 = vadd.f32 %v1187, %v1224
    %v1230 = vxor.u32 %v1229, 2147483648
    %v1231 = vmul.f32 %v1230, 1.442695
    %v1232 = vpow.pop %v1231
    %v1233 = vadd.f32 %v1232, 1.0
    %v1234 = vrcp.pop %v1233
    %v1235 = vmul.f32 1.0, %v1234
    %1236 = vrot.lane.b32.xlu0 %v1235, 64
    %v1237 = vpop.permute.xlu0 %1236
    %v1238 = vmul.f32 %v1237, %v1224
    %v1239 = vadd.f32 %v1187, %v1238
    %v1240 = vtanh.pop %v1239
    %1241 = vrot.lane.b32.xlu0 %v1235, 96
    %v1242 = vpop.permute.xlu0 %1241
    %1243 = vrot.lane.b32.xlu0 %v1240, 64
    %v1244 = vpop.permute.xlu0 %1243
    %v1245 = vsub.f32 1.0, %v1242
    %v1246 = vmul.f32 %v1245, %v1244
    %v1247 = vmul.f32 %v1242, %v1184
    %v1248 = vadd.f32 %v1246, %v1247
    %v1249 = vsel %vm104, %v1248, 0.0
    %1250 = vst [vmem:[%s501] sm:$0xff] %v1249
    %s1251 = scalar_lea.vmem [#allocation3], 40
    %v1252 = vld [vmem:[%s1251] sm:$0xff]
    %v1253 = vpack.c.bf16 %v1249, %v1249
    %1254 = vmatprep.subr.bf16.mxu0 0
    %1255 = vmatpush1.bf16.msra.mxu0 %v913
    %1256 = vmatprep.subr.bf16.mxu0 0
    %1257 = vmatpush1.bf16.msra.mxu0 %v914
    %1258 = vmatprep.subr.bf16.mxu0 0
    %1259 = vmatpush1.bf16.msra.mxu0 %v915
    %1260 = vmatprep.subr.bf16.mxu0 0
    %1261 = vmatpush1.bf16.msra.mxu0 %v916
    %1262 = vmatprep.subr.bf16.mxu0 0
    %1263 = vmatpush1.bf16.msra.mxu0 %v917
    %1264 = vmatprep.subr.bf16.mxu0 0
    %1265 = vmatpush1.bf16.msra.mxu0 %v918
    %1266 = vmatprep.subr.bf16.mxu0 0
    %1267 = vmatpush1.bf16.msra.mxu0 %v919
    %1268 = vmatprep.subr.bf16.mxu0 0
    %1269 = vmatpush1.bf16.msra.mxu0 %v920
    %1270 = vmatprep.subr.bf16.mxu0 0
    %1271 = vmatpush1.bf16.msra.mxu0 0
    %1272 = vmatprep.subr.bf16.mxu0 0
    %1273 = vmatpush1.bf16.msra.mxu0 0
    %1274 = vmatprep.subr.bf16.mxu0 0
    %1275 = vmatpush1.bf16.msra.mxu0 0
    %1276 = vmatprep.subr.bf16.mxu0 0
    %1277 = vmatpush1.bf16.msra.mxu0 0
    %1278 = vmatprep.subr.bf16.mxu0 0
    %1279 = vmatpush1.bf16.msra.mxu0 0
    %1280 = vmatprep.subr.bf16.mxu0 0
    %1281 = vmatpush1.bf16.msra.mxu0 0
    %1282 = vmatprep.subr.bf16.mxu0 0
    %1283 = vmatpush1.bf16.msra.mxu0 0
    %1284 = vmatprep.subr.bf16.mxu0 0
    %1285 = vmatpush1.bf16.msra.mxu0 0
    %1286 = vmatprep.mubr.bf16.mxu0 0
    %1287 = vmatmul.mubr.bf16.gmra.mrb[0].mxu0 %v1253
    %v1288 = vpop.f32.mrb[0].mxu0
    %v1289 = vadd.f32 %v878, %v1288
    %v1290 = vpop.f32.mrb[0].mxu0
    %v1291 = vpop.f32.mrb[0].mxu0
    %v1292 = vpop.f32.mrb[0].mxu0
    %1293 = vdwg.mxu0
    %v1294 = vadd.f32 %v1252, %v1289
    %v1295 = vxor.u32 %v1294, 2147483648
    %v1296 = vmul.f32 %v1295, 1.442695
    %v1297 = vpow.pop %v1296
    %v1298 = vadd.f32 %v1297, 1.0
    %v1299 = vrcp.pop %v1298
    %v1300 = vmul.f32 1.0, %v1299
    %1301 = vrot.lane.b32.xlu0 %v1300, 64
    %v1302 = vpop.permute.xlu0 %1301
    %v1303 = vmul.f32 %v1302, %v1289
    %v1304 = vadd.f32 %v1252, %v1303
    %v1305 = vtanh.pop %v1304
    %1306 = vrot.lane.b32.xlu0 %v1300, 96
    %v1307 = vpop.permute.xlu0 %1306
    %1308 = vrot.lane.b32.xlu0 %v1305, 64
    %v1309 = vpop.permute.xlu0 %1308
    %v1310 = vsub.f32 1.0, %v1307
    %v1311 = vmul.f32 %v1310, %v1309
    %v1312 = vmul.f32 %v1307, %v1249
    %v1313 = vadd.f32 %v1311, %v1312
    %v1314 = vsel %vm104, %v1313, 0.0
    %1315 = vst [vmem:[%s567] sm:$0xff] %v1314
    %s1316 = scalar_lea.vmem [#allocation3], 48
    %v1317 = vld [vmem:[%s1316] sm:$0xff]
    %v1318 = vpack.c.bf16 %v1314, %v1314
    %1319 = vmatprep.subr.bf16.mxu0 0
    %1320 = vmatpush1.bf16.msra.mxu0 %v913
    %1321 = vmatprep.subr.bf16.mxu0 0
    %1322 = vmatpush1.bf16.msra.mxu0 %v914
    %1323 = vmatprep.subr.bf16.mxu0 0
    %1324 = vmatpush1.bf16.msra.mxu0 %v915
    %1325 = vmatprep.subr.bf16.mxu0 0
    %1326 = vmatpush1.bf16.msra.mxu0 %v916
    %1327 = vmatprep.subr.bf16.mxu0 0
    %1328 = vmatpush1.bf16.msra.mxu0 %v917
    %1329 = vmatprep.subr.bf16.mxu0 0
    %1330 = vmatpush1.bf16.msra.mxu0 %v918
    %1331 = vmatprep.subr.bf16.mxu0 0
    %1332 = vmatpush1.bf16.msra.mxu0 %v919
    %1333 = vmatprep.subr.bf16.mxu0 0
    %1334 = vmatpush1.bf16.msra.mxu0 %v920
    %1335 = vmatprep.subr.bf16.mxu0 0
    %1336 = vmatpush1.bf16.msra.mxu0 0
    %1337 = vmatprep.subr.bf16.mxu0 0
    %1338 = vmatpush1.bf16.msra.mxu0 0
    %1339 = vmatprep.subr.bf16.mxu0 0
    %1340 = vmatpush1.bf16.msra.mxu0 0
    %1341 = vmatprep.subr.bf16.mxu0 0
    %1342 = vmatpush1.bf16.msra.mxu0 0
    %1343 = vmatprep.subr.bf16.mxu0 0
    %1344 = vmatpush1.bf16.msra.mxu0 0
    %1345 = vmatprep.subr.bf16.mxu0 0
    %1346 = vmatpush1.bf16.msra.mxu0 0
    %1347 = vmatprep.subr.bf16.mxu0 0
    %1348 = vmatpush1.bf16.msra.mxu0 0
    %1349 = vmatprep.subr.bf16.mxu0 0
    %1350 = vmatpush1.bf16.msra.mxu0 0
    %1351 = vmatprep.mubr.bf16.mxu0 0
    %1352 = vmatmul.mubr.bf16.gmra.mrb[0].mxu0 %v1318
    %v1353 = vpop.f32.mrb[0].mxu0
    %v1354 = vadd.f32 %v878, %v1353
    %v1355 = vpop.f32.mrb[0].mxu0
    %v1356 = vpop.f32.mrb[0].mxu0
    %v1357 = vpop.f32.mrb[0].mxu0
    %1358 = vdwg.mxu0
    %v1359 = vadd.f32 %v1317, %v1354
    %v1360 = vxor.u32 %v1359, 2147483648
    %v1361 = vmul.f32 %v1360, 1.442695
    %v1362 = vpow.pop %v1361
    %v1363 = vadd.f32 %v1362, 1.0
    %v1364 = vrcp.pop %v1363
    %v1365 = vmul.f32 1.0, %v1364
    %1366 = vrot.lane.b32.xlu0 %v1365, 64
    %v1367 = vpop.permute.xlu0 %1366
    %v1368 = vmul.f32 %v1367, %v1354
    %v1369 = vadd.f32 %v1317, %v1368
    %v1370 = vtanh.pop %v1369
    %1371 = vrot.lane.b32.xlu0 %v1365, 96
    %v1372 = vpop.permute.xlu0 %1371
    %1373 = vrot.lane.b32.xlu0 %v1370, 64
    %v1374 = vpop.permute.xlu0 %1373
    %v1375 = vsub.f32 1.0, %v1372
    %v1376 = vmul.f32 %v1375, %v1374
    %v1377 = vmul.f32 %v1372, %v1314
    %v1378 = vadd.f32 %v1376, %v1377
    %v1379 = vsel %vm104, %v1378, 0.0
    %1380 = vst [vmem:[%s633] sm:$0xff] %v1379
    %s1381 = scalar_lea.vmem [#allocation3], 56
    %v1382 = vld [vmem:[%s1381] sm:$0xff]
    %v1383 = vpack.c.bf16 %v1379, %v1379
    %1384 = vmatprep.subr.bf16.mxu0 0
    %1385 = vmatpush1.bf16.msra.mxu0 %v913
    %1386 = vmatprep.subr.bf16.mxu0 0
    %1387 = vmatpush1.bf16.msra.mxu0 %v914
    %1388 = vmatprep.subr.bf16.mxu0 0
    %1389 = vmatpush1.bf16.msra.mxu0 %v915
    %1390 = vmatprep.subr.bf16.mxu0 0
    %1391 = vmatpush1.bf16.msra.mxu0 %v916
    %1392 = vmatprep.subr.bf16.mxu0 0
    %1393 = vmatpush1.bf16.msra.mxu0 %v917
    %1394 = vmatprep.subr.bf16.mxu0 0
    %1395 = vmatpush1.bf16.msra.mxu0 %v918
    %1396 = vmatprep.subr.bf16.mxu0 0
    %1397 = vmatpush1.bf16.msra.mxu0 %v919
    %1398 = vmatprep.subr.bf16.mxu0 0
    %1399 = vmatpush1.bf16.msra.mxu0 %v920
    %1400 = vmatprep.subr.bf16.mxu0 0
    %1401 = vmatpush1.bf16.msra.mxu0 0
    %1402 = vmatprep.subr.bf16.mxu0 0
    %1403 = vmatpush1.bf16.msra.mxu0 0
    %1404 = vmatprep.subr.bf16.mxu0 0
    %1405 = vmatpush1.bf16.msra.mxu0 0
    %1406 = vmatprep.subr.bf16.mxu0 0
    %1407 = vmatpush1.bf16.msra.mxu0 0
    %1408 = vmatprep.subr.bf16.mxu0 0
    %1409 = vmatpush1.bf16.msra.mxu0 0
    %1410 = vmatprep.subr.bf16.mxu0 0
    %1411 = vmatpush1.bf16.msra.mxu0 0
    %1412 = vmatprep.subr.bf16.mxu0 0
    %1413 = vmatpush1.bf16.msra.mxu0 0
    %1414 = vmatprep.subr.bf16.mxu0 0
    %1415 = vmatpush1.bf16.msra.mxu0 0
    %1416 = vmatprep.mubr.bf16.mxu0 0
    %1417 = vmatmul.mubr.bf16.gmra.mrb[0].mxu0 %v1383
    %v1418 = vpop.f32.mrb[0].mxu0
    %v1419 = vadd.f32 %v878, %v1418
    %v1420 = vpop.f32.mrb[0].mxu0
    %v1421 = vpop.f32.mrb[0].mxu0
    %v1422 = vpop.f32.mrb[0].mxu0
    %1423 = vdwg.mxu0
    %v1424 = vadd.f32 %v1382, %v1419
    %v1425 = vxor.u32 %v1424, 2147483648
    %v1426 = vmul.f32 %v1425, 1.442695
    %v1427 = vpow.pop %v1426
    %v1428 = vadd.f32 %v1427, 1.0
    %v1429 = vrcp.pop %v1428
    %v1430 = vmul.f32 1.0, %v1429
    %1431 = vrot.lane.b32.xlu0 %v1430, 64
    %v1432 = vpop.permute.xlu0 %1431
    %v1433 = vmul.f32 %v1432, %v1419
    %v1434 = vadd.f32 %v1382, %v1433
    %v1435 = vtanh.pop %v1434
    %1436 = vrot.lane.b32.xlu0 %v1430, 96
    %v1437 = vpop.permute.xlu0 %1436
    %1438 = vrot.lane.b32.xlu0 %v1435, 64
    %v1439 = vpop.permute.xlu0 %1438
    %v1440 = vsub.f32 1.0, %v1437
    %v1441 = vmul.f32 %v1440, %v1439
    %v1442 = vmul.f32 %v1437, %v1379
    %v1443 = vadd.f32 %v1441, %v1442
    %v1444 = vsel %vm104, %v1443, 0.0
    %1445 = vst [vmem:[%s699] sm:$0xff] %v1444
    %v1446 = vld [vmem:[#allocation2] sm:$0xff]
    %v1447 = vld [vmem:[#allocation2 + $0x8] sm:$0xff]
    %v1448 = vld [vmem:[#allocation2 + $0x10] sm:$0xff]
    %v1449 = vld [vmem:[#allocation2 + $0x18] sm:$0xff]
    %v1450 = vld [vmem:[#allocation2 + $0x20] sm:$0xff]
    %v1451 = vld [vmem:[#allocation2 + $0x28] sm:$0xff]
    %v1452 = vld [vmem:[#allocation2 + $0x30] sm:$0xff]
    %v1453 = vld [vmem:[#allocation2 + $0x38] sm:$0xff]
    %v1454 = vpack.c.bf16 %v1447, %v1446
    %v1455 = vpack.c.bf16 %v1449, %v1448
    %v1456 = vpack.c.bf16 %v1451, %v1450
    %v1457 = vpack.c.bf16 %v1453, %v1452
    %v1458 = vld [vmem:[#allocation12] sm:$0xf]
    %v1459 = vld [vmem:[#allocation12 + $0x4] sm:$0xf]
    %v1460 = vld [vmem:[#allocation12 + $0x8] sm:$0xf]
    %v1461 = vld [vmem:[#allocation12 + $0xc] sm:$0xf]
    %v1462 = vld [vmem:[#allocation12 + $0x10] sm:$0xf]
    %v1463 = vld [vmem:[#allocation12 + $0x14] sm:$0xf]
    %v1464 = vld [vmem:[#allocation12 + $0x18] sm:$0xf]
    %v1465 = vld [vmem:[#allocation12 + $0x1c] sm:$0xf]
    %v1466 = vld [vmem:[#allocation12 + $0x20] sm:$0xf]
    %v1467 = vld [vmem:[#allocation12 + $0x24] sm:$0xf]
    %v1468 = vld [vmem:[#allocation12 + $0x28] sm:$0xf]
    %v1469 = vld [vmem:[#allocation12 + $0x2c] sm:$0xf]
    %v1470 = vld [vmem:[#allocation12 + $0x30] sm:$0xf]
    %v1471 = vld [vmem:[#allocation12 + $0x34] sm:$0xf]
    %v1472 = vld [vmem:[#allocation12 + $0x38] sm:$0xf]
    %v1473 = vld [vmem:[#allocation12 + $0x3c] sm:$0xf]
    %v1474 = vld [vmem:[%s8] sm:$0x1]
    %v1476 = vlaneseq
    %v1477 = vshrl.u32 %v1476, 7
    %v1478 = vsub.s32 0, %v1477
    %v1479 = vrot.slane %v1474, %v1478
    %v1497 = vunpack.c.l.b16 %v1458
    %v1498 = vunpack.c.l.b16 %v1459
    %v1499 = vunpack.c.l.b16 %v1460
    %v1500 = vunpack.c.l.b16 %v1461
    %v1501 = vunpack.c.l.b16 %v1462
    %v1502 = vunpack.c.l.b16 %v1463
    %v1503 = vunpack.c.l.b16 %v1464
    %v1504 = vunpack.c.l.b16 %v1465
    %v1505 = vunpack.c.l.b16 %v1466
    %v1506 = vunpack.c.l.b16 %v1467
    %v1507 = vunpack.c.l.b16 %v1468
    %v1508 = vunpack.c.l.b16 %v1469
    %v1509 = vunpack.c.l.b16 %v1470
    %v1510 = vunpack.c.l.b16 %v1471
    %v1511 = vunpack.c.l.b16 %v1472
    %v1512 = vunpack.c.l.b16 %v1473
    %v1513 = vpack.c.b16 %v1498, %v1497
    %v1514 = vpack.c.b16 %v1500, %v1499
    %v1515 = vpack.c.b16 %v1502, %v1501
    %v1516 = vpack.c.b16 %v1504, %v1503
    %v1517 = vpack.c.b16 %v1506, %v1505
    %v1518 = vpack.c.b16 %v1508, %v1507
    %v1519 = vpack.c.b16 %v1510, %v1509
    %v1520 = vpack.c.b16 %v1512, %v1511
    %1529 = vmatprep.subr.bf16.mxu0 0
    %1530 = vmatpush1.bf16.msra.mxu0 %v1513
    %1531 = vmatprep.subr.bf16.mxu0 0
    %1532 = vmatpush1.bf16.msra.mxu0 %v1514
    %1533 = vmatprep.subr.bf16.mxu0 0
    %1534 = vmatpush1.bf16.msra.mxu0 %v1515
    %1535 = vmatprep.subr.bf16.mxu0 0
    %1536 = vmatpush1.bf16.msra.mxu0 %v1516
    %1537 = vmatprep.subr.bf16.mxu0 0
    %1538 = vmatpush1.bf16.msra.mxu0 %v1517
    %1539 = vmatprep.subr.bf16.mxu0 0
    %1540 = vmatpush1.bf16.msra.mxu0 %v1518
    %1541 = vmatprep.subr.bf16.mxu0 0
    %1542 = vmatpush1.bf16.msra.mxu0 %v1519
    %1543 = vmatprep.subr.bf16.mxu0 0
    %1544 = vmatpush1.bf16.msra.mxu0 %v1520
    %1545 = vmatprep.subr.bf16.mxu0 0
    %1546 = vmatpush1.bf16.msra.mxu0 0
    %1547 = vmatprep.subr.bf16.mxu0 0
    %1548 = vmatpush1.bf16.msra.mxu0 0
    %1549 = vmatprep.subr.bf16.mxu0 0
    %1550 = vmatpush1.bf16.msra.mxu0 0
    %1551 = vmatprep.subr.bf16.mxu0 0
    %1552 = vmatpush1.bf16.msra.mxu0 0
    %1553 = vmatprep.subr.bf16.mxu0 0
    %1554 = vmatpush1.bf16.msra.mxu0 0
    %1555 = vmatprep.subr.bf16.mxu0 0
    %1556 = vmatpush1.bf16.msra.mxu0 0
    %1557 = vmatprep.subr.bf16.mxu0 0
    %1558 = vmatpush1.bf16.msra.mxu0 0
    %1559 = vmatprep.subr.bf16.mxu0 0
    %1560 = vmatpush1.bf16.msra.mxu0 0
    %1561 = vmatprep.mubr.bf16.mxu0 0
    %1562 = vmatmul.mubr.bf16.gmra.mrb[0].mxu0 %v1454
    %v1563 = vpop.f32.mrb[0].mxu0
    %v1564 = vadd.f32 %v1479, %v1563
    %v1565 = vpop.f32.mrb[0].mxu0
    %v1566 = vpop.f32.mrb[0].mxu0
    %v1567 = vadd.f32 %v1479, %v1566
    %v1568 = vpop.f32.mrb[0].mxu0
    %1569 = vmatprep.mubr.bf16.mxu0 0
    %1570 = vmatmul.mubr.bf16.gmra.mrb[0].mxu0 %v1455
    %v1571 = vpop.f32.mrb[0].mxu0
    %v1572 = vadd.f32 %v1479, %v1571
    %v1573 = vpop.f32.mrb[0].mxu0
    %v1574 = vpop.f32.mrb[0].mxu0
    %v1575 = vadd.f32 %v1479, %v1574
    %v1576 = vpop.f32.mrb[0].mxu0
    %1577 = vmatprep.mubr.bf16.mxu0 0
    %1578 = vmatmul.mubr.bf16.gmra.mrb[0].mxu0 %v1456
    %v1579 = vpop.f32.mrb[0].mxu0
    %v1580 = vadd.f32 %v1479, %v1579
    %v1581 = vpop.f32.mrb[0].mxu0
    %v1582 = vpop.f32.mrb[0].mxu0
    %v1583 = vadd.f32 %v1479, %v1582
    %v1584 = vpop.f32.mrb[0].mxu0
    %1585 = vmatprep.mubr.bf16.mxu0 0
    %1586 = vmatmul.mubr.bf16.gmra.mrb[0].mxu0 %v1457
    %v1587 = vpop.f32.mrb[0].mxu0
    %v1588 = vadd.f32 %v1479, %v1587
    %v1589 = vpop.f32.mrb[0].mxu0
    %v1590 = vpop.f32.mrb[0].mxu0
    %v1591 = vadd.f32 %v1479, %v1590
    %v1592 = vpop.f32.mrb[0].mxu0
    %1593 = vdwg.mxu0
    %1594 = vst [vmem:[#allocation13] sm:$0xff] %v1564
    %1595 = vst [vmem:[#allocation13 + $0x8] sm:$0xff] %v1567
    %1596 = vst [vmem:[#allocation13 + $0x10] sm:$0xff] %v1572
    %1597 = vst [vmem:[#allocation13 + $0x18] sm:$0xff] %v1575
    %1598 = vst [vmem:[#allocation13 + $0x20] sm:$0xff] %v1580
    %1599 = vst [vmem:[#allocation13 + $0x28] sm:$0xff] %v1583
    %1600 = vst [vmem:[#allocation13 + $0x30] sm:$0xff] %v1588
    %1601 = vst [vmem:[#allocation13 + $0x38] sm:$0xff] %v1591
    // Predicated region
    $region58: #{tpu_custom_call.1} parent=1 // pred_check
      _
    $region59: #{tpu_custom_call.1} parent=1 // pred_check_branch
      %1603 = sbr.rel (0) target = $region61
    $region60: #{tpu_custom_call.1} parent=1 // pred_region
      %s1605 = ssub.s32 1024, 1024
      %1606 = vsyncadd [#allocation6], %s1605
      %s1607 = sshll.u32 [#allocation13], 4
      %s1608 = int_to_ptr.vmem [resolvable:$true] %s1607
      %1613 = dma.vmem_to_hbm [thread:$0]  %s1608, 1024, %s9, [#allocation6], 128, 128, 8
    $region61: #{tpu_custom_call.1} parent=1 // pred_fallthru
      _
    // Predicated region
    $region62: #{tpu_custom_call.1} parent=1 // pred_check
      _
    $region63: #{tpu_custom_call.1} parent=1 // pred_check_branch
      %1615 = sbr.rel (0) target = $region65
    $region64: #{tpu_custom_call.1} parent=1 // pred_region
      %1616 = dma.done [#allocation6], 1024
    $region65: #{tpu_custom_call.1} parent=1 // pred_fallthru
      _
    %1617 = vsyncpa [#allocation5], 1
    %1618 = vsyncpa [#allocation8], 1
    %1619 = vsyncpa [#allocation11], 1
    %1620 = vsyncpa [#allocation6], 1

</llo_original>
